<compile_context>
chip_gen: v6e
topology: v6e:2x2x1
jax: 0.10.0
libtpu: 0.0.40
codegen_flags: <defaults>
</compile_context>

<pallas_src>
import math

import numpy as np
import jax
import jax.numpy as jnp
from jax.experimental import pallas as pl
from jax.experimental.pallas import tpu as pltpu

# ---------------- small, runnable model config ----------------
LAYERS = 2
BLOCKS = 2
DILATION_CHANNELS = 8
RESIDUAL_CHANNELS = 8
SKIP_CHANNELS = 16
CLASSES = 16
INPUT_LENGTH = 16
KERNEL_SIZE = 3          # odd kernel => padding=K//2 preserves length
IN_CHANNELS = 2          # start_conv expects 2 input channels
BATCH = 2
DTYPE = jnp.float32


def build_dilations():
    dil = []
    init_dilation = 1
    for _b in range(BLOCKS):
        new_dilation = 1
        for _i in range(LAYERS):
            dil.append((new_dilation, init_dilation))
            init_dilation = new_dilation
            new_dilation *= 2
    return dil


DILATIONS = build_dilations()
NLAYERS = BLOCKS * LAYERS
MAX_DIL = max(d for d, _ in DILATIONS)
PAD = MAX_DIL * (KERNEL_SIZE // 2)      # per-segment zero halo, covers every dilation
LP = INPUT_LENGTH + 2 * PAD             # padded per-batch segment length
W = BATCH * LP                          # work width: batch folded into the lane axis
GW = W + 2 * PAD                        # xbuf width (edge halo so every tap slice is in-bounds)

# the dilate() reshuffle is exactly a dilated conv here (dilate never implicitly zero-pads)
for _d, _ in DILATIONS:
    assert INPUT_LENGTH % _d == 0


# ---------------- fused Pallas kernel ----------------
def _wavenet_fused_kernel(inp_ref, mask_ref, wstart_ref, wfg_ref, wr_ref, ws_ref,
                          wfc_ref, bfc_ref, out_ref, xbuf, skip_acc):
    """Entire WaveNet forward for the whole batch in one kernel invocation.

    inp_ref   : (Cin, W)          input, batch folded into lanes, zero-padded segments
    mask_ref  : (1, W)            1.0 on valid lanes, 0.0 on the per-segment halo
    wstart_ref: (Cr, Cin)         start 1x1 conv
    wfg_ref   : (NL, 2*Cd, K*Cr)  filter||gate im2col weights per layer
    wr_ref    : (NL, Cr, Cd)      residual 1x1 convs
    ws_ref    : (NL, Cs, Cd)      skip 1x1 convs
    wfc_ref   : (CLASSES, Cs, L)  fc weight reshaped to match torch.flatten(skip, 1)
    bfc_ref   : (CLASSES, 1)      fc bias
    out_ref   : (CLASSES, BATCH)  logits (wrapper transposes to (BATCH, CLASSES))
    xbuf      : VMEM (Cr, GW)     current residual activation + zero halo (scratch)
    skip_acc  : VMEM (Cs, W)      running skip accumulator (scratch)
    """
    mask = mask_ref[...]                                   # (1, W)
    cd = DILATION_CHANNELS
    half = KERNEL_SIZE // 2

    # start_conv (1x1): one matmul over the whole batch; halo lanes stay zero (no bias).
    x0 = jnp.dot(wstart_ref[...], inp_ref[...], preferred_element_type=jnp.float32)
    xbuf[...] = jnp.zeros((RESIDUAL_CHANNELS, GW), jnp.float32)
    xbuf[:, PAD:PAD + W] = x0 * mask
    skip_acc[...] = jnp.zeros((SKIP_CHANNELS, W), jnp.float32)

    # static unroll over the 4 layers; all activations stay in VMEM
    for i in range(NLAYERS):
        d, _init_d = DILATIONS[i]
        xfull = xbuf[...]                                  # (Cr, GW)
        x_old = xfull[:, PAD:PAD + W]                      # (Cr, W)
        # dilated conv == K shifted views of the padded base-layout activation (im2col)
        taps = [xfull[:, PAD + (k - half) * d: PAD + (k - half) * d + W]
                for k in range(KERNEL_SIZE)]
        cat = jnp.concatenate(taps, axis=0)                # (K*Cr, W)
        # filter and gate in a single MXU pass
        fg = jnp.dot(wfg_ref[i], cat, preferred_element_type=jnp.float32)   # (2*Cd, W)
        xg = jnp.tanh(fg[:cd]) * jax.nn.sigmoid(fg[cd:])   # gated activation
        xg = xg * mask                                     # keep per-segment halo exactly zero
        # skip = skip_conv(s) + skip   (skip accumulator stays resident in VMEM)
        skip_acc[...] = skip_acc[...] + jnp.dot(ws_ref[i], xg,
                                                preferred_element_type=jnp.float32)
        # x = residual_conv(x) + residual
        xbuf[:, PAD:PAD + W] = (jnp.dot(wr_ref[i], xg, preferred_element_type=jnp.float32)
                                + x_old)

    # fc = ReLU -> Linear, computed per batch element on its (Cs, L) segment.
    r = jnp.maximum(skip_acc[...], 0.0)                    # (Cs, W)
    w3 = wfc_ref[...]                                      # (CLASSES, Cs, L)
    for b in range(BATCH):
        seg = r[:, b * LP + PAD: b * LP + PAD + INPUT_LENGTH]           # (Cs, L)
        prod = w3 * seg[None, :, :]                                     # (CLASSES, Cs, L)
        v = jnp.sum(jnp.sum(prod, axis=-1), axis=-1, keepdims=True)     # (CLASSES, 1)
        out_ref[:, b:b + 1] = v + bfc_ref[...]


# ---------------- wrapper: pack operands and call the fused kernel ----------------
def _make_mask_np():
    m = np.zeros((1, W), np.float32)
    for b in range(BATCH):
        m[0, b * LP + PAD: b * LP + PAD + INPUT_LENGTH] = 1.0
    return m


_MASK_NP = _make_mask_np()


def _pack_input(inp):
    # (B, Cin, L) -> (Cin, B*LP): batch folded into lanes, each segment zero-padded by PAD
    xp = jnp.pad(inp, ((0, 0), (0, 0), (PAD, PAD)))        # (B, Cin, LP)
    xp = jnp.transpose(xp, (1, 0, 2))                      # (Cin, B, LP)
    return jnp.reshape(xp, (IN_CHANNELS, W))


def _pack_weights(params):
    kcr = KERNEL_SIZE * RESIDUAL_CHANNELS
    wfg = []
    for i in range(NLAYERS):
        # stored (K, Cd, Cr) -> (Cd, K*Cr) so columns match the im2col tap ordering
        wf = jnp.reshape(jnp.transpose(params['wf'][i], (1, 0, 2)),
                         (DILATION_CHANNELS, kcr))
        wg = jnp.reshape(jnp.transpose(params['wg'][i], (1, 0, 2)),
                         (DILATION_CHANNELS, kcr))
        wfg.append(jnp.concatenate([wf, wg], axis=0))      # (2*Cd, K*Cr)
    wfg = jnp.stack(wfg, axis=0)                           # (NL, 2*Cd, K*Cr)
    wr = jnp.stack(params['wr'], axis=0)                   # (NL, Cr, Cd)
    ws = jnp.stack(params['ws'], axis=0)                   # (NL, Cs, Cd)
    fc_w3 = jnp.reshape(jnp.transpose(params['fc_w_t'], (1, 0)),
                        (CLASSES, SKIP_CHANNELS, INPUT_LENGTH))
    fc_b = jnp.transpose(params['fc_b'], (1, 0))           # (CLASSES, 1)
    return params['start_w'], wfg, wr, ws, fc_w3, fc_b


@jax.jit
def wavenet_forward_pallas(params, inp):
    wstart, wfg, wr, ws, fc_w3, fc_b = _pack_weights(params)
    inp_work = _pack_input(inp)
    mask = jnp.asarray(_MASK_NP)
    out_t = pl.pallas_call(
        _wavenet_fused_kernel,
        out_shape=jax.ShapeDtypeStruct((CLASSES, BATCH), DTYPE),
        scratch_shapes=[pltpu.VMEM((RESIDUAL_CHANNELS, GW), jnp.float32),
                        pltpu.VMEM((SKIP_CHANNELS, W), jnp.float32)],
    )(inp_work, mask, wstart, wfg, wr, ws, fc_w3, fc_b)
    return jnp.transpose(out_t, (1, 0))                    # (BATCH, CLASSES)


# ---------------- pure-JAX reference (faithful to the PyTorch forward) ----------------
def dilate_jax(x, dilation, init_dilation=1, pad_start=True):
    n, c, l = x.shape
    dilation_factor = dilation / init_dilation
    if dilation_factor == 1:
        return x
    new_l = int(np.ceil(l / dilation_factor) * dilation_factor)
    if new_l != l:
        num_pad = new_l - l
        pad_width = ((0, 0), (0, 0), (num_pad, 0)) if pad_start else ((0, 0), (0, 0), (0, num_pad))
        x = jnp.pad(x, pad_width)
        l = new_l
    l_new = int(math.ceil(l * init_dilation / dilation))
    n_new = int(math.ceil(n * dilation / init_dilation))
    x = jnp.transpose(x, (1, 2, 0))          # (c, l, n)  == permute(1,2,0).contiguous()
    x = jnp.reshape(x, (c, l_new, n_new))    # == .view(c, l, n)
    x = jnp.transpose(x, (2, 0, 1))          # (n_new, c, l_new)
    return x


def _pointwise_ref(x, w):
    return jnp.einsum('oc,ncl->nol', w, x)


def _skip_ref(s, w, prev):
    return jnp.einsum('oc,ncl->nol', w, s) + prev


def _gated_ref(residual, wf, wg, wr):
    n, cr, L = residual.shape
    K = wf.shape[0]
    pad = K // 2
    rp = jnp.pad(residual, ((0, 0), (0, 0), (pad, pad)))
    filt = sum(jnp.einsum('dc,ncl->ndl', wf[k], rp[:, :, k:k + L]) for k in range(K))
    gate = sum(jnp.einsum('dc,ncl->ndl', wg[k], rp[:, :, k:k + L]) for k in range(K))
    xg = jnp.tanh(filt) * jax.nn.sigmoid(gate)
    xo = jnp.einsum('rd,ndl->nrl', wr, xg) + residual
    return xg, xo


def _fc_ref(x, w_t, b):
    return jnp.maximum(x, 0.0) @ w_t + b


def wavenet_forward_ref(params, inp):
    x = _pointwise_ref(inp, params['start_w'])              # start_conv (1x1)
    skip = None
    for i in range(NLAYERS):
        dilation, init_dilation = DILATIONS[i]
        residual = dilate_jax(x, dilation, init_dilation)
        xg, x = _gated_ref(residual, params['wf'][i], params['wg'][i], params['wr'][i])
        s = xg
        if xg.shape[2] != 1:
            s = dilate_jax(xg, 1, init_dilation=dilation)
        if skip is None:                                     # torch: skip==0 -> except -> skip = s + 0
            prev = jnp.zeros((s.shape[0], SKIP_CHANNELS, s.shape[2]), s.dtype)
        else:
            prev = skip[:, :, -s.shape[2]:]                  # skip = skip[:, :, -s.size(2):]
        skip = _skip_ref(s, params['ws'][i], prev)           # skip = skip_conv(s) + skip
    flat = jnp.reshape(skip, (skip.shape[0], -1))            # torch.flatten(x, start_dim=1)
    return _fc_ref(flat, params['fc_w_t'], params['fc_b'])   # nn.ReLU() -> nn.Linear


# ---------------- deterministic parameter init ----------------
def init_params(key):
    keys = iter(jax.random.split(key, 4 * NLAYERS + 8))

    def nrm(shape, scale=0.1):
        return scale * jax.random.normal(next(keys), shape, dtype=DTYPE)

    params = {}
    # Conv1d(2, res_ch, k=1, bias=False).weight -> (res_ch, 2, 1) squeezed to (res_ch, 2)
    params['start_w'] = nrm((RESIDUAL_CHANNELS, IN_CHANNELS))
    # filter/gate convs: torch weight (Cd, Cr, K) -> stored as (K, Cd, Cr)
    params['wf'] = [jnp.transpose(nrm((DILATION_CHANNELS, RESIDUAL_CHANNELS, KERNEL_SIZE)), (2, 0, 1))
                    for _ in range(NLAYERS)]
    params['wg'] = [jnp.transpose(nrm((DILATION_CHANNELS, RESIDUAL_CHANNELS, KERNEL_SIZE)), (2, 0, 1))
                    for _ in range(NLAYERS)]
    # residual / skip 1x1 convs (k=1 squeezed)
    params['wr'] = [nrm((RESIDUAL_CHANNELS, DILATION_CHANNELS)) for _ in range(NLAYERS)]
    params['ws'] = [nrm((SKIP_CHANNELS, DILATION_CHANNELS)) for _ in range(NLAYERS)]
    # fc: nn.Linear(skip_channels * input_length, classes)  (weight transposed for the ref path)
    out_features = SKIP_CHANNELS * INPUT_LENGTH
    params['fc_w_t'] = jnp.transpose(nrm((CLASSES, out_features)), (1, 0))
    params['fc_b'] = nrm((1, CLASSES))
    return params


if __name__ == "__main__":
    key = jax.random.PRNGKey(0)
    kp, kx = jax.random.split(key)
    params = init_params(kp)
    x = jax.random.normal(kx, (BATCH, IN_CHANNELS, INPUT_LENGTH), dtype=DTYPE)

    out = wavenet_forward_pallas(params, x)
    out = jax.block_until_ready(out)

    ref = wavenet_forward_ref(params, x)
    ref = jax.block_until_ready(ref)

    assert out.shape == (BATCH, CLASSES), out.shape
    np.testing.assert_allclose(np.asarray(out), np.asarray(ref), rtol=1e-4, atol=1e-4)
    print("KERNEL_OK")
</pallas_src>

<mosaic_0001>
module attributes {stable_mosaic.version = 11 : i64} {
  func.func @_wavenet_fused_kernel(%arg0: memref<2x40xf32, #tpu.memory_space<vmem>>, %arg1: memref<1x40xf32, #tpu.memory_space<vmem>>, %arg2: memref<8x2xf32, #tpu.memory_space<vmem>>, %arg3: memref<4x16x24xf32, #tpu.memory_space<vmem>>, %arg4: memref<4x8x8xf32, #tpu.memory_space<vmem>>, %arg5: memref<4x16x8xf32, #tpu.memory_space<vmem>>, %arg6: memref<16x16x16xf32, #tpu.memory_space<vmem>>, %arg7: memref<16x1xf32, #tpu.memory_space<vmem>>, %arg8: memref<16x2xf32, #tpu.memory_space<vmem>>, %arg9: memref<8x44xf32, #tpu.memory_space<vmem>>, %arg10: memref<16x40xf32, #tpu.memory_space<vmem>>) attributes {dimension_semantics = [], scalar_prefetch = 0 : i64, scratch_operands = 2 : i64, tpu.core_type = #tpu.core_type<tc>} {
    %c0 = arith.constant 0 : index
    %c0_0 = arith.constant 0 : index
    %0 = vector.load %arg1[%c0, %c0_0] : memref<1x40xf32, #tpu.memory_space<vmem>>, vector<1x40xf32>
    %c0_1 = arith.constant 0 : index
    %c0_2 = arith.constant 0 : index
    %1 = vector.load %arg2[%c0_1, %c0_2] : memref<8x2xf32, #tpu.memory_space<vmem>>, vector<8x2xf32>
    %c0_3 = arith.constant 0 : index
    %c0_4 = arith.constant 0 : index
    %2 = vector.load %arg0[%c0_3, %c0_4] : memref<2x40xf32, #tpu.memory_space<vmem>>, vector<2x40xf32>
    %cst = arith.constant dense<0.000000e+00> : vector<8x40xf32>
    %3 = tpu.matmul %1, %2, %cst {dimension_numbers = #tpu.dot_dimension_numbers<[1], [0], [0], [1], [0, 0, 1, 1], [], []>} : vector<8x2xf32>, vector<2x40xf32>, vector<8x40xf32> -> vector<8x40xf32>
    %cst_5 = arith.constant 0.000000e+00 : f32
    %4 = vector.broadcast %cst_5 : f32 to vector<8x44xf32>
    %c0_6 = arith.constant 0 : index
    %c0_7 = arith.constant 0 : index
    %5 = vector.load %arg9[%c0_6, %c0_7] : memref<8x44xf32, #tpu.memory_space<vmem>>, vector<8x44xf32>
    tpu.vector_store %arg9[%c0_6, %c0_7], %4 {strides = array<i32>} : memref<8x44xf32, #tpu.memory_space<vmem>>, vector<8x44xf32>,
    %6 = vector.broadcast %0 : vector<1x40xf32> to vector<8x40xf32>
    %7 = arith.mulf %3, %6 : vector<8x40xf32>
    %c0_8 = arith.constant 0 : index
    %c2 = arith.constant 2 : index
    %8 = vector.load %arg9[%c0_8, %c2] : memref<8x44xf32, #tpu.memory_space<vmem>>, vector<8x40xf32>
    tpu.vector_store %arg9[%c0_8, %c2], %7 {strides = array<i32>} : memref<8x44xf32, #tpu.memory_space<vmem>>, vector<8x40xf32>,
    %cst_9 = arith.constant 0.000000e+00 : f32
    %9 = vector.broadcast %cst_9 : f32 to vector<16x40xf32>
    %c0_10 = arith.constant 0 : index
    %c0_11 = arith.constant 0 : index
    %10 = vector.load %arg10[%c0_10, %c0_11] : memref<16x40xf32, #tpu.memory_space<vmem>>, vector<16x40xf32>
    tpu.vector_store %arg10[%c0_10, %c0_11], %9 {strides = array<i32>} : memref<16x40xf32, #tpu.memory_space<vmem>>, vector<16x40xf32>,
    %c0_12 = arith.constant 0 : index
    %c0_13 = arith.constant 0 : index
    %11 = vector.load %arg9[%c0_12, %c0_13] : memref<8x44xf32, #tpu.memory_space<vmem>>, vector<8x44xf32>
    %12 = vector.extract_strided_slice %11 {offsets = [0, 2], sizes = [8, 40], strides = [1, 1]} : vector<8x44xf32> to vector<8x40xf32>
    %13 = vector.extract_strided_slice %11 {offsets = [0, 1], sizes = [8, 40], strides = [1, 1]} : vector<8x44xf32> to vector<8x40xf32>
    %14 = vector.extract_strided_slice %11 {offsets = [0, 2], sizes = [8, 40], strides = [1, 1]} : vector<8x44xf32> to vector<8x40xf32>
    %15 = vector.extract_strided_slice %11 {offsets = [0, 3], sizes = [8, 40], strides = [1, 1]} : vector<8x44xf32> to vector<8x40xf32>
    %16 = tpu.concatenate %13, %14, %15 in 0 : vector<8x40xf32>, vector<8x40xf32>, vector<8x40xf32> -> vector<24x40xf32>
    %c0_14 = arith.constant 0 : index
    %c0_15 = arith.constant 0 : index
    %c0_16 = arith.constant 0 : index
    %17 = vector.load %arg3[%c0_14, %c0_15, %c0_16] : memref<4x16x24xf32, #tpu.memory_space<vmem>>, vector<1x16x24xf32>
    %18 = vector.shape_cast %17 : vector<1x16x24xf32> to vector<16x24xf32>
    %cst_17 = arith.constant dense<0.000000e+00> : vector<16x40xf32>
    %19 = tpu.matmul %18, %16, %cst_17 {dimension_numbers = #tpu.dot_dimension_numbers<[1], [0], [0], [1], [0, 0, 1, 1], [], []>} : vector<16x24xf32>, vector<24x40xf32>, vector<16x40xf32> -> vector<16x40xf32>
    %20 = vector.extract_strided_slice %19 {offsets = [0, 0], sizes = [8, 40], strides = [1, 1]} : vector<16x40xf32> to vector<8x40xf32>
    %21 = math.tanh %20 : vector<8x40xf32>
    %22 = vector.extract_strided_slice %19 {offsets = [8, 0], sizes = [8, 40], strides = [1, 1]} : vector<16x40xf32> to vector<8x40xf32>
    %23 = arith.negf %22 : vector<8x40xf32>
    %24 = math.exp %23 : vector<8x40xf32>
    %cst_18 = arith.constant 1.000000e+00 : f32
    %25 = vector.broadcast %cst_18 : f32 to vector<8x40xf32>
    %26 = arith.addf %25, %24 : vector<8x40xf32>
    %27 = arith.divf %25, %26 : vector<8x40xf32>
    %28 = arith.mulf %21, %27 : vector<8x40xf32>
    %29 = vector.broadcast %0 : vector<1x40xf32> to vector<8x40xf32>
    %30 = arith.mulf %28, %29 : vector<8x40xf32>
    %c0_19 = arith.constant 0 : index
    %c0_20 = arith.constant 0 : index
    %31 = vector.load %arg10[%c0_19, %c0_20] : memref<16x40xf32, #tpu.memory_space<vmem>>, vector<16x40xf32>
    %c0_21 = arith.constant 0 : index
    %c0_22 = arith.constant 0 : index
    %c0_23 = arith.constant 0 : index
    %32 = vector.load %arg5[%c0_21, %c0_22, %c0_23] : memref<4x16x8xf32, #tpu.memory_space<vmem>>, vector<1x16x8xf32>
    %33 = vector.shape_cast %32 : vector<1x16x8xf32> to vector<16x8xf32>
    %cst_24 = arith.constant dense<0.000000e+00> : vector<16x40xf32>
    %34 = tpu.matmul %33, %30, %cst_24 {dimension_numbers = #tpu.dot_dimension_numbers<[1], [0], [0], [1], [0, 0, 1, 1], [], []>} : vector<16x8xf32>, vector<8x40xf32>, vector<16x40xf32> -> vector<16x40xf32>
    %35 = arith.addf %31, %34 : vector<16x40xf32>
    %c0_25 = arith.constant 0 : index
    %c0_26 = arith.constant 0 : index
    %36 = vector.load %arg10[%c0_25, %c0_26] : memref<16x40xf32, #tpu.memory_space<vmem>>, vector<16x40xf32>
    tpu.vector_store %arg10[%c0_25, %c0_26], %35 {strides = array<i32>} : memref<16x40xf32, #tpu.memory_space<vmem>>, vector<16x40xf32>,
    %c0_27 = arith.constant 0 : index
    %c0_28 = arith.constant 0 : index
    %c0_29 = arith.constant 0 : index
    %37 = vector.load %arg4[%c0_27, %c0_28, %c0_29] : memref<4x8x8xf32, #tpu.memory_space<vmem>>, vector<1x8x8xf32>
    %38 = vector.shape_cast %37 : vector<1x8x8xf32> to vector<8x8xf32>
    %cst_30 = arith.constant dense<0.000000e+00> : vector<8x40xf32>
    %39 = tpu.matmul %38, %30, %cst_30 {dimension_numbers = #tpu.dot_dimension_numbers<[1], [0], [0], [1], [0, 0, 1, 1], [], []>} : vector<8x8xf32>, vector<8x40xf32>, vector<8x40xf32> -> vector<8x40xf32>
    %40 = arith.addf %39, %12 : vector<8x40xf32>
    %c0_31 = arith.constant 0 : index
    %c2_32 = arith.constant 2 : index
    %41 = vector.load %arg9[%c0_31, %c2_32] : memref<8x44xf32, #tpu.memory_space<vmem>>, vector<8x40xf32>
    tpu.vector_store %arg9[%c0_31, %c2_32], %40 {strides = array<i32>} : memref<8x44xf32, #tpu.memory_space<vmem>>, vector<8x40xf32>,
    %c0_33 = arith.constant 0 : index
    %c0_34 = arith.constant 0 : index
    %42 = vector.load %arg9[%c0_33, %c0_34] : memref<8x44xf32, #tpu.memory_space<vmem>>, vector<8x44xf32>
    %43 = vector.extract_strided_slice %42 {offsets = [0, 2], sizes = [8, 40], strides = [1, 1]} : vector<8x44xf32> to vector<8x40xf32>
    %44 = vector.extract_strided_slice %42 {offsets = [0, 0], sizes = [8, 40], strides = [1, 1]} : vector<8x44xf32> to vector<8x40xf32>
    %45 = vector.extract_strided_slice %42 {offsets = [0, 2], sizes = [8, 40], strides = [1, 1]} : vector<8x44xf32> to vector<8x40xf32>
    %46 = vector.extract_strided_slice %42 {offsets = [0, 4], sizes = [8, 40], strides = [1, 1]} : vector<8x44xf32> to vector<8x40xf32>
    %47 = tpu.concatenate %44, %45, %46 in 0 : vector<8x40xf32>, vector<8x40xf32>, vector<8x40xf32> -> vector<24x40xf32>
    %c1 = arith.constant 1 : index
    %c0_35 = arith.constant 0 : index
    %c0_36 = arith.constant 0 : index
    %48 = vector.load %arg3[%c1, %c0_35, %c0_36] : memref<4x16x24xf32, #tpu.memory_space<vmem>>, vector<1x16x24xf32>
    %49 = vector.shape_cast %48 : vector<1x16x24xf32> to vector<16x24xf32>
    %cst_37 = arith.constant dense<0.000000e+00> : vector<16x40xf32>
    %50 = tpu.matmul %49, %47, %cst_37 {dimension_numbers = #tpu.dot_dimension_numbers<[1], [0], [0], [1], [0, 0, 1, 1], [], []>} : vector<16x24xf32>, vector<24x40xf32>, vector<16x40xf32> -> vector<16x40xf32>
    %51 = vector.extract_strided_slice %50 {offsets = [0, 0], sizes = [8, 40], strides = [1, 1]} : vector<16x40xf32> to vector<8x40xf32>
    %52 = math.tanh %51 : vector<8x40xf32>
    %53 = vector.extract_strided_slice %50 {offsets = [8, 0], sizes = [8, 40], strides = [1, 1]} : vector<16x40xf32> to vector<8x40xf32>
    %54 = arith.negf %53 : vector<8x40xf32>
    %55 = math.exp %54 : vector<8x40xf32>
    %cst_38 = arith.constant 1.000000e+00 : f32
    %56 = vector.broadcast %cst_38 : f32 to vector<8x40xf32>
    %57 = arith.addf %56, %55 : vector<8x40xf32>
    %58 = arith.divf %56, %57 : vector<8x40xf32>
    %59 = arith.mulf %52, %58 : vector<8x40xf32>
    %60 = vector.broadcast %0 : vector<1x40xf32> to vector<8x40xf32>
    %61 = arith.mulf %59, %60 : vector<8x40xf32>
    %c0_39 = arith.constant 0 : index
    %c0_40 = arith.constant 0 : index
    %62 = vector.load %arg10[%c0_39, %c0_40] : memref<16x40xf32, #tpu.memory_space<vmem>>, vector<16x40xf32>
    %c1_41 = arith.constant 1 : index
    %c0_42 = arith.constant 0 : index
    %c0_43 = arith.constant 0 : index
    %63 = vector.load %arg5[%c1_41, %c0_42, %c0_43] : memref<4x16x8xf32, #tpu.memory_space<vmem>>, vector<1x16x8xf32>
    %64 = vector.shape_cast %63 : vector<1x16x8xf32> to vector<16x8xf32>
    %cst_44 = arith.constant dense<0.000000e+00> : vector<16x40xf32>
    %65 = tpu.matmul %64, %61, %cst_44 {dimension_numbers = #tpu.dot_dimension_numbers<[1], [0], [0], [1], [0, 0, 1, 1], [], []>} : vector<16x8xf32>, vector<8x40xf32>, vector<16x40xf32> -> vector<16x40xf32>
    %66 = arith.addf %62, %65 : vector<16x40xf32>
    %c0_45 = arith.constant 0 : index
    %c0_46 = arith.constant 0 : index
    %67 = vector.load %arg10[%c0_45, %c0_46] : memref<16x40xf32, #tpu.memory_space<vmem>>, vector<16x40xf32>
    tpu.vector_store %arg10[%c0_45, %c0_46], %66 {strides = array<i32>} : memref<16x40xf32, #tpu.memory_space<vmem>>, vector<16x40xf32>,
    %c1_47 = arith.constant 1 : index
    %c0_48 = arith.constant 0 : index
    %c0_49 = arith.constant 0 : index
    %68 = vector.load %arg4[%c1_47, %c0_48, %c0_49] : memref<4x8x8xf32, #tpu.memory_space<vmem>>, vector<1x8x8xf32>
    %69 = vector.shape_cast %68 : vector<1x8x8xf32> to vector<8x8xf32>
    %cst_50 = arith.constant dense<0.000000e+00> : vector<8x40xf32>
    %70 = tpu.matmul %69, %61, %cst_50 {dimension_numbers = #tpu.dot_dimension_numbers<[1], [0], [0], [1], [0, 0, 1, 1], [], []>} : vector<8x8xf32>, vector<8x40xf32>, vector<8x40xf32> -> vector<8x40xf32>
    %71 = arith.addf %70, %43 : vector<8x40xf32>
    %c0_51 = arith.constant 0 : index
    %c2_52 = arith.constant 2 : index
    %72 = vector.load %arg9[%c0_51, %c2_52] : memref<8x44xf32, #tpu.memory_space<vmem>>, vector<8x40xf32>
    tpu.vector_store %arg9[%c0_51, %c2_52], %71 {strides = array<i32>} : memref<8x44xf32, #tpu.memory_space<vmem>>, vector<8x40xf32>,
    %c0_53 = arith.constant 0 : index
    %c0_54 = arith.constant 0 : index
    %73 = vector.load %arg9[%c0_53, %c0_54] : memref<8x44xf32, #tpu.memory_space<vmem>>, vector<8x44xf32>
    %74 = vector.extract_strided_slice %73 {offsets = [0, 2], sizes = [8, 40], strides = [1, 1]} : vector<8x44xf32> to vector<8x40xf32>
    %75 = vector.extract_strided_slice %73 {offsets = [0, 1], sizes = [8, 40], strides = [1, 1]} : vector<8x44xf32> to vector<8x40xf32>
    %76 = vector.extract_strided_slice %73 {offsets = [0, 2], sizes = [8, 40], strides = [1, 1]} : vector<8x44xf32> to vector<8x40xf32>
    %77 = vector.extract_strided_slice %73 {offsets = [0, 3], sizes = [8, 40], strides = [1, 1]} : vector<8x44xf32> to vector<8x40xf32>
    %78 = tpu.concatenate %75, %76, %77 in 0 : vector<8x40xf32>, vector<8x40xf32>, vector<8x40xf32> -> vector<24x40xf32>
    %c2_55 = arith.constant 2 : index
    %c0_56 = arith.constant 0 : index
    %c0_57 = arith.constant 0 : index
    %79 = vector.load %arg3[%c2_55, %c0_56, %c0_57] : memref<4x16x24xf32, #tpu.memory_space<vmem>>, vector<1x16x24xf32>
    %80 = vector.shape_cast %79 : vector<1x16x24xf32> to vector<16x24xf32>
    %cst_58 = arith.constant dense<0.000000e+00> : vector<16x40xf32>
    %81 = tpu.matmul %80, %78, %cst_58 {dimension_numbers = #tpu.dot_dimension_numbers<[1], [0], [0], [1], [0, 0, 1, 1], [], []>} : vector<16x24xf32>, vector<24x40xf32>, vector<16x40xf32> -> vector<16x40xf32>
    %82 = vector.extract_strided_slice %81 {offsets = [0, 0], sizes = [8, 40], strides = [1, 1]} : vector<16x40xf32> to vector<8x40xf32>
    %83 = math.tanh %82 : vector<8x40xf32>
    %84 = vector.extract_strided_slice %81 {offsets = [8, 0], sizes = [8, 40], strides = [1, 1]} : vector<16x40xf32> to vector<8x40xf32>
    %85 = arith.negf %84 : vector<8x40xf32>
    %86 = math.exp %85 : vector<8x40xf32>
    %cst_59 = arith.constant 1.000000e+00 : f32
    %87 = vector.broadcast %cst_59 : f32 to vector<8x40xf32>
    %88 = arith.addf %87, %86 : vector<8x40xf32>
    %89 = arith.divf %87, %88 : vector<8x40xf32>
    %90 = arith.mulf %83, %89 : vector<8x40xf32>
    %91 = vector.broadcast %0 : vector<1x40xf32> to vector<8x40xf32>
    %92 = arith.mulf %90, %91 : vector<8x40xf32>
    %c0_60 = arith.constant 0 : index
    %c0_61 = arith.constant 0 : index
    %93 = vector.load %arg10[%c0_60, %c0_61] : memref<16x40xf32, #tpu.memory_space<vmem>>, vector<16x40xf32>
    %c2_62 = arith.constant 2 : index
    %c0_63 = arith.constant 0 : index
    %c0_64 = arith.constant 0 : index
    %94 = vector.load %arg5[%c2_62, %c0_63, %c0_64] : memref<4x16x8xf32, #tpu.memory_space<vmem>>, vector<1x16x8xf32>
    %95 = vector.shape_cast %94 : vector<1x16x8xf32> to vector<16x8xf32>
    %cst_65 = arith.constant dense<0.000000e+00> : vector<16x40xf32>
    %96 = tpu.matmul %95, %92, %cst_65 {dimension_numbers = #tpu.dot_dimension_numbers<[1], [0], [0], [1], [0, 0, 1, 1], [], []>} : vector<16x8xf32>, vector<8x40xf32>, vector<16x40xf32> -> vector<16x40xf32>
    %97 = arith.addf %93, %96 : vector<16x40xf32>
    %c0_66 = arith.constant 0 : index
    %c0_67 = arith.constant 0 : index
    %98 = vector.load %arg10[%c0_66, %c0_67] : memref<16x40xf32, #tpu.memory_space<vmem>>, vector<16x40xf32>
    tpu.vector_store %arg10[%c0_66, %c0_67], %97 {strides = array<i32>} : memref<16x40xf32, #tpu.memory_space<vmem>>, vector<16x40xf32>,
    %c2_68 = arith.constant 2 : index
    %c0_69 = arith.constant 0 : index
    %c0_70 = arith.constant 0 : index
    %99 = vector.load %arg4[%c2_68, %c0_69, %c0_70] : memref<4x8x8xf32, #tpu.memory_space<vmem>>, vector<1x8x8xf32>
    %100 = vector.shape_cast %99 : vector<1x8x8xf32> to vector<8x8xf32>
    %cst_71 = arith.constant dense<0.000000e+00> : vector<8x40xf32>
    %101 = tpu.matmul %100, %92, %cst_71 {dimension_numbers = #tpu.dot_dimension_numbers<[1], [0], [0], [1], [0, 0, 1, 1], [], []>} : vector<8x8xf32>, vector<8x40xf32>, vector<8x40xf32> -> vector<8x40xf32>
    %102 = arith.addf %101, %74 : vector<8x40xf32>
    %c0_72 = arith.constant 0 : index
    %c2_73 = arith.constant 2 : index
    %103 = vector.load %arg9[%c0_72, %c2_73] : memref<8x44xf32, #tpu.memory_space<vmem>>, vector<8x40xf32>
    tpu.vector_store %arg9[%c0_72, %c2_73], %102 {strides = array<i32>} : memref<8x44xf32, #tpu.memory_space<vmem>>, vector<8x40xf32>,
    %c0_74 = arith.constant 0 : index
    %c0_75 = arith.constant 0 : index
    %104 = vector.load %arg9[%c0_74, %c0_75] : memref<8x44xf32, #tpu.memory_space<vmem>>, vector<8x44xf32>
    %105 = vector.extract_strided_slice %104 {offsets = [0, 2], sizes = [8, 40], strides = [1, 1]} : vector<8x44xf32> to vector<8x40xf32>
    %106 = vector.extract_strided_slice %104 {offsets = [0, 0], sizes = [8, 40], strides = [1, 1]} : vector<8x44xf32> to vector<8x40xf32>
    %107 = vector.extract_strided_slice %104 {offsets = [0, 2], sizes = [8, 40], strides = [1, 1]} : vector<8x44xf32> to vector<8x40xf32>
    %108 = vector.extract_strided_slice %104 {offsets = [0, 4], sizes = [8, 40], strides = [1, 1]} : vector<8x44xf32> to vector<8x40xf32>
    %109 = tpu.concatenate %106, %107, %108 in 0 : vector<8x40xf32>, vector<8x40xf32>, vector<8x40xf32> -> vector<24x40xf32>
    %c3 = arith.constant 3 : index
    %c0_76 = arith.constant 0 : index
    %c0_77 = arith.constant 0 : index
    %110 = vector.load %arg3[%c3, %c0_76, %c0_77] : memref<4x16x24xf32, #tpu.memory_space<vmem>>, vector<1x16x24xf32>
    %111 = vector.shape_cast %110 : vector<1x16x24xf32> to vector<16x24xf32>
    %cst_78 = arith.constant dense<0.000000e+00> : vector<16x40xf32>
    %112 = tpu.matmul %111, %109, %cst_78 {dimension_numbers = #tpu.dot_dimension_numbers<[1], [0], [0], [1], [0, 0, 1, 1], [], []>} : vector<16x24xf32>, vector<24x40xf32>, vector<16x40xf32> -> vector<16x40xf32>
    %113 = vector.extract_strided_slice %112 {offsets = [0, 0], sizes = [8, 40], strides = [1, 1]} : vector<16x40xf32> to vector<8x40xf32>
    %114 = math.tanh %113 : vector<8x40xf32>
    %115 = vector.extract_strided_slice %112 {offsets = [8, 0], sizes = [8, 40], strides = [1, 1]} : vector<16x40xf32> to vector<8x40xf32>
    %116 = arith.negf %115 : vector<8x40xf32>
    %117 = math.exp %116 : vector<8x40xf32>
    %cst_79 = arith.constant 1.000000e+00 : f32
    %118 = vector.broadcast %cst_79 : f32 to vector<8x40xf32>
    %119 = arith.addf %118, %117 : vector<8x40xf32>
    %120 = arith.divf %118, %119 : vector<8x40xf32>
    %121 = arith.mulf %114, %120 : vector<8x40xf32>
    %122 = vector.broadcast %0 : vector<1x40xf32> to vector<8x40xf32>
    %123 = arith.mulf %121, %122 : vector<8x40xf32>
    %c0_80 = arith.constant 0 : index
    %c0_81 = arith.constant 0 : index
    %124 = vector.load %arg10[%c0_80, %c0_81] : memref<16x40xf32, #tpu.memory_space<vmem>>, vector<16x40xf32>
    %c3_82 = arith.constant 3 : index
    %c0_83 = arith.constant 0 : index
    %c0_84 = arith.constant 0 : index
    %125 = vector.load %arg5[%c3_82, %c0_83, %c0_84] : memref<4x16x8xf32, #tpu.memory_space<vmem>>, vector<1x16x8xf32>
    %126 = vector.shape_cast %125 : vector<1x16x8xf32> to vector<16x8xf32>
    %cst_85 = arith.constant dense<0.000000e+00> : vector<16x40xf32>
    %127 = tpu.matmul %126, %123, %cst_85 {dimension_numbers = #tpu.dot_dimension_numbers<[1], [0], [0], [1], [0, 0, 1, 1], [], []>} : vector<16x8xf32>, vector<8x40xf32>, vector<16x40xf32> -> vector<16x40xf32>
    %128 = arith.addf %124, %127 : vector<16x40xf32>
    %c0_86 = arith.constant 0 : index
    %c0_87 = arith.constant 0 : index
    %129 = vector.load %arg10[%c0_86, %c0_87] : memref<16x40xf32, #tpu.memory_space<vmem>>, vector<16x40xf32>
    tpu.vector_store %arg10[%c0_86, %c0_87], %128 {strides = array<i32>} : memref<16x40xf32, #tpu.memory_space<vmem>>, vector<16x40xf32>,
    %c3_88 = arith.constant 3 : index
    %c0_89 = arith.constant 0 : index
    %c0_90 = arith.constant 0 : index
    %130 = vector.load %arg4[%c3_88, %c0_89, %c0_90] : memref<4x8x8xf32, #tpu.memory_space<vmem>>, vector<1x8x8xf32>
    %131 = vector.shape_cast %130 : vector<1x8x8xf32> to vector<8x8xf32>
    %cst_91 = arith.constant dense<0.000000e+00> : vector<8x40xf32>
    %132 = tpu.matmul %131, %123, %cst_91 {dimension_numbers = #tpu.dot_dimension_numbers<[1], [0], [0], [1], [0, 0, 1, 1], [], []>} : vector<8x8xf32>, vector<8x40xf32>, vector<8x40xf32> -> vector<8x40xf32>
    %133 = arith.addf %132, %105 : vector<8x40xf32>
    %c0_92 = arith.constant 0 : index
    %c2_93 = arith.constant 2 : index
    %134 = vector.load %arg9[%c0_92, %c2_93] : memref<8x44xf32, #tpu.memory_space<vmem>>, vector<8x40xf32>
    tpu.vector_store %arg9[%c0_92, %c2_93], %133 {strides = array<i32>} : memref<8x44xf32, #tpu.memory_space<vmem>>, vector<8x40xf32>,
    %c0_94 = arith.constant 0 : index
    %c0_95 = arith.constant 0 : index
    %135 = vector.load %arg10[%c0_94, %c0_95] : memref<16x40xf32, #tpu.memory_space<vmem>>, vector<16x40xf32>
    %cst_96 = arith.constant 0.000000e+00 : f32
    %136 = vector.broadcast %cst_96 : f32 to vector<16x40xf32>
    %137 = arith.maximumf %135, %136 : vector<16x40xf32>
    %c0_97 = arith.constant 0 : index
    %c0_98 = arith.constant 0 : index
    %c0_99 = arith.constant 0 : index
    %138 = vector.load %arg6[%c0_97, %c0_98, %c0_99] : memref<16x16x16xf32, #tpu.memory_space<vmem>>, vector<16x16x16xf32>
    %139 = vector.extract_strided_slice %137 {offsets = [0, 2], sizes = [16, 16], strides = [1, 1]} : vector<16x40xf32> to vector<16x16xf32>
    %140 = vector.shape_cast %139 : vector<16x16xf32> to vector<1x16x16xf32>
    %141 = vector.broadcast %140 : vector<1x16x16xf32> to vector<16x16x16xf32>
    %142 = arith.mulf %138, %141 : vector<16x16x16xf32>
    %cst_100 = arith.constant dense<0.000000e+00> : vector<16x16xf32>
    %143 = vector.multi_reduction <add>, %142, %cst_100 [2] : vector<16x16x16xf32> to vector<16x16xf32>
    %cst_101 = arith.constant dense<0.000000e+00> : vector<16xf32>
    %144 = vector.multi_reduction <add>, %143, %cst_101 [1] : vector<16x16xf32> to vector<16xf32>
    %145 = vector.shape_cast %144 : vector<16xf32> to vector<16x1xf32>
    %c0_102 = arith.constant 0 : index
    %c0_103 = arith.constant 0 : index
    %146 = vector.load %arg7[%c0_102, %c0_103] : memref<16x1xf32, #tpu.memory_space<vmem>>, vector<16x1xf32>
    %147 = arith.addf %145, %146 : vector<16x1xf32>
    %c0_104 = arith.constant 0 : index
    %c0_105 = arith.constant 0 : index
    %148 = vector.load %arg8[%c0_104, %c0_105] : memref<16x2xf32, #tpu.memory_space<vmem>>, vector<16x1xf32>
    tpu.vector_store %arg8[%c0_104, %c0_105], %147 {strides = array<i32>} : memref<16x2xf32, #tpu.memory_space<vmem>>, vector<16x1xf32>,
    %149 = vector.extract_strided_slice %137 {offsets = [0, 22], sizes = [16, 16], strides = [1, 1]} : vector<16x40xf32> to vector<16x16xf32>
    %150 = vector.shape_cast %149 : vector<16x16xf32> to vector<1x16x16xf32>
    %151 = vector.broadcast %150 : vector<1x16x16xf32> to vector<16x16x16xf32>
    %152 = arith.mulf %138, %151 : vector<16x16x16xf32>
    %cst_106 = arith.constant dense<0.000000e+00> : vector<16x16xf32>
    %153 = vector.multi_reduction <add>, %152, %cst_106 [2] : vector<16x16x16xf32> to vector<16x16xf32>
    %cst_107 = arith.constant dense<0.000000e+00> : vector<16xf32>
    %154 = vector.multi_reduction <add>, %153, %cst_107 [1] : vector<16x16xf32> to vector<16xf32>
    %155 = vector.shape_cast %154 : vector<16xf32> to vector<16x1xf32>
    %c0_108 = arith.constant 0 : index
    %c0_109 = arith.constant 0 : index
    %156 = vector.load %arg7[%c0_108, %c0_109] : memref<16x1xf32, #tpu.memory_space<vmem>>, vector<16x1xf32>
    %157 = arith.addf %155, %156 : vector<16x1xf32>
    %c0_110 = arith.constant 0 : index
    %c1_111 = arith.constant 1 : index
    %158 = vector.load %arg8[%c0_110, %c1_111] : memref<16x2xf32, #tpu.memory_space<vmem>>, vector<16x1xf32>
    tpu.vector_store %arg8[%c0_110, %c1_111], %157 {strides = array<i32>} : memref<16x2xf32, #tpu.memory_space<vmem>>, vector<16x1xf32>,
    return
  }
}

</mosaic_0001>

<llo_original>
// kernel: wavenet_forward_pallas.1
$region0: #{wavenet_forward_pallas.1}
  #allocation0 [shape = 'u32[]', space=smem, size = 0x4, offset = 0x4, fixed_abs, tag = 'smem constant byte address 0x4 - core index']
  #allocation1 [shape = 'u32[144,128]{1,0:T(1,128)}', space=vmem, size = 0x12000, scoped, tag = 'internal scratch']
  #allocation2 [shape = 'f32[8,44]{1,0:T(8,128)}', space=vmem, size = 0x1000, scoped, tag = 'scratch operand']
  #allocation3 [shape = 'f32[16,40]{1,0:T(8,128)}', space=vmem, size = 0x2000, scoped, tag = 'scratch operand']
  %s0 = inlined_call_operand.vmem [shape: f32[2,40], index: 0, kind: input, shape index: {}]
  %s1 = inlined_call_operand.vmem [shape: f32[1,40], index: 1, kind: input, shape index: {}]
  %s2 = inlined_call_operand.vmem [shape: f32[8,2], index: 2, kind: input, shape index: {}]
  %s3 = inlined_call_operand.vmem [shape: f32[4,16,24], index: 3, kind: input, shape index: {}]
  %s4 = inlined_call_operand.vmem [shape: f32[4,8,8], index: 4, kind: input, shape index: {}]
  %s5 = inlined_call_operand.vmem [shape: f32[4,16,8], index: 5, kind: input, shape index: {}]
  %s6 = inlined_call_operand.vmem [shape: f32[16,16,16], index: 6, kind: input, shape index: {}]
  %s7 = inlined_call_operand.vmem [shape: f32[16,1], index: 7, kind: input, shape index: {}]
  %s8 = inlined_call_operand.vmem [shape: f32[16,2], index: 8, kind: output, shape index: {}]
  %s9 = sld [smem:[#allocation0]]
  $region42: #{wavenet_forward_pallas.1} parent=0
    _
  %s11 = ssub.s32 1, %s9
  %s12 = scalar_select 0, %s11, %s9
  // Predicated region
  $region2: #{wavenet_forward_pallas.1} parent=0 // pred_check
    _
  $region3: #{wavenet_forward_pallas.1} parent=0 // pred_check_branch
    %14 = sbr.rel (0) target = $region5
  $region4: #{wavenet_forward_pallas.1} parent=0 // pred_region
    _
  $region5: #{wavenet_forward_pallas.1} parent=0 // pred_fallthru
    _
  // Predicated region
  $region6: #{wavenet_forward_pallas.1} parent=0 // pred_check
    _
  $region7: #{wavenet_forward_pallas.1} parent=0 // pred_check_branch
    %16 = sbr.rel (0) target = $region9
  $region8: #{wavenet_forward_pallas.1} parent=0 // pred_region
    _
  $region9: #{wavenet_forward_pallas.1} parent=0 // pred_fallthru
    _
  // Predicated region
  $region10: #{wavenet_forward_pallas.1} parent=0 // pred_check
    _
  $region11: #{wavenet_forward_pallas.1} parent=0 // pred_check_branch
    %18 = sbr.rel (0) target = $region13
  $region12: #{wavenet_forward_pallas.1} parent=0 // pred_region
    _
  $region13: #{wavenet_forward_pallas.1} parent=0 // pred_fallthru
    _
  // Predicated region
  $region14: #{wavenet_forward_pallas.1} parent=0 // pred_check
    _
  $region15: #{wavenet_forward_pallas.1} parent=0 // pred_check_branch
    %20 = sbr.rel (0) target = $region17
  $region16: #{wavenet_forward_pallas.1} parent=0 // pred_region
    _
  $region17: #{wavenet_forward_pallas.1} parent=0 // pred_fallthru
    _
  // Predicated region
  $region18: #{wavenet_forward_pallas.1} parent=0 // pred_check
    _
  $region19: #{wavenet_forward_pallas.1} parent=0 // pred_check_branch
    %22 = sbr.rel (0) target = $region21
  $region20: #{wavenet_forward_pallas.1} parent=0 // pred_region
    _
  $region21: #{wavenet_forward_pallas.1} parent=0 // pred_fallthru
    _
  // Predicated region
  $region22: #{wavenet_forward_pallas.1} parent=0 // pred_check
    _
  $region23: #{wavenet_forward_pallas.1} parent=0 // pred_check_branch
    %24 = sbr.rel (0) target = $region25
  $region24: #{wavenet_forward_pallas.1} parent=0 // pred_region
    _
  $region25: #{wavenet_forward_pallas.1} parent=0 // pred_fallthru
    _
  // Predicated region
  $region26: #{wavenet_forward_pallas.1} parent=0 // pred_check
    _
  $region27: #{wavenet_forward_pallas.1} parent=0 // pred_check_branch
    %26 = sbr.rel (0) target = $region29
  $region28: #{wavenet_forward_pallas.1} parent=0 // pred_region
    _
  $region29: #{wavenet_forward_pallas.1} parent=0 // pred_fallthru
    _
  // Predicated region
  $region30: #{wavenet_forward_pallas.1} parent=0 // pred_check
    _
  $region31: #{wavenet_forward_pallas.1} parent=0 // pred_check_branch
    %28 = sbr.rel (0) target = $region33
  $region32: #{wavenet_forward_pallas.1} parent=0 // pred_region
    _
  $region33: #{wavenet_forward_pallas.1} parent=0 // pred_fallthru
    _
  %v29 = vld [vmem:[%s1] sm:$0x1]
  %v30 = vld [vmem:[%s2] sm:$0xff]
  %v31 = vld [vmem:[%s0] sm:$0x3]
  %vm32 = vcmask 15360
  %v34 = vsel %vm32, %v30, 0
  %vm36 = vcmask 1041408
  %v38 = vsel %vm36, %v31, 0
  %40 = vmatprep.subr.mxu0 0.0
  %41 = vmatpush1.msra.mxu0 0.0
  %42 = vmatprep.subr.mxu0 0.0
  %43 = vmatpush1.msra.mxu0 0.0
  %44 = vmatprep.subr.mxu0 0.0
  %45 = vmatpush1.msra.mxu0 0.0
  %46 = vmatprep.subr.mxu0 0.0
  %47 = vmatpush1.msra.mxu0 0.0
  %48 = vmatprep.subr.mxu0 0.0
  %49 = vmatpush1.msra.mxu0 0.0
  %50 = vmatprep.subr.mxu0 0.0
  %51 = vmatpush1.msra.mxu0 0.0
  %52 = vmatprep.subr.mxu0 0.0
  %53 = vmatpush1.msra.mxu0 0.0
  %54 = vmatprep.subr.mxu0 0.0
  %55 = vmatpush1.msra.mxu0 0.0
  %56 = vmatprep.subr.mxu0 0.0
  %57 = vmatpush1.msra.mxu0 0.0
  %58 = vmatprep.subr.mxu0 0.0
  %59 = vmatpush1.msra.mxu0 0.0
  %60 = vmatprep.subr.mxu0 0.0
  %61 = vmatpush1.msra.mxu0 0.0
  %62 = vmatprep.subr.mxu0 0.0
  %63 = vmatpush1.msra.mxu0 0.0
  %64 = vmatprep.subr.mxu0 0.0
  %65 = vmatpush1.msra.mxu0 0.0
  %66 = vmatprep.subr.mxu0 0.0
  %67 = vmatpush1.msra.mxu0 0.0
  %68 = vmatprep.subr.mxu0 0.0
  %69 = vmatpush1.msra.mxu0 0.0
  %70 = vmatprep.subr.mxu0 0.0
  %71 = vmatpush1.msra.mxu0 %v38
  %72 = vmatprep.subr.mxu0 0.0
  %73 = vmatpush2.msra.mxu0 0.0
  %74 = vmatprep.subr.mxu0 0.0
  %75 = vmatpush2.msra.mxu0 0.0
  %76 = vmatprep.subr.mxu0 0.0
  %77 = vmatpush2.msra.mxu0 0.0
  %78 = vmatprep.subr.mxu0 0.0
  %79 = vmatpush2.msra.mxu0 0.0
  %80 = vmatprep.subr.mxu0 0.0
  %81 = vmatpush2.msra.mxu0 0.0
  %82 = vmatprep.subr.mxu0 0.0
  %83 = vmatpush2.msra.mxu0 0.0
  %84 = vmatprep.subr.mxu0 0.0
  %85 = vmatpush2.msra.mxu0 0.0
  %86 = vmatprep.subr.mxu0 0.0
  %87 = vmatpush2.msra.mxu0 0.0
  %88 = vmatprep.subr.mxu0 0.0
  %89 = vmatpush2.msra.mxu0 0.0
  %90 = vmatprep.subr.mxu0 0.0
  %91 = vmatpush2.msra.mxu0 0.0
  %92 = vmatprep.subr.mxu0 0.0
  %93 = vmatpush2.msra.mxu0 0.0
  %94 = vmatprep.subr.mxu0 0.0
  %95 = vmatpush2.msra.mxu0 0.0
  %96 = vmatprep.subr.mxu0 0.0
  %97 = vmatpush2.msra.mxu0 0.0
  %98 = vmatprep.subr.mxu0 0.0
  %99 = vmatpush2.msra.mxu0 0.0
  %100 = vmatprep.subr.mxu0 0.0
  %101 = vmatpush2.msra.mxu0 0.0
  %102 = vmatprep.subr.mxu0 0.0
  %103 = vmatpush2.msra.mxu0 0.0
  %104 = vmatprep.mubr.f32.mxu0 0.0
  %105 = vmatmul.mubr.f32.gmra.mxu0 %v34
  %v106 = vpop.f32.mrf.mxu0
  %v107 = vadd.f32 0.0, %v106
  %v108 = vpop.f32.mrf.mxu0
  %109 = vdwg.mxu0
  %vm110 = vcmask 359424
  %111 = vst.msk [vmem:[#allocation2] sm:$0xff] %vm110, 0.0
  %v113 = vlaneseq
  %v114 = vshrl.u32 %v113, 7
  %v115 = vsub.s32 0, %v114
  %v116 = vrot.slane %v29, %v115
  %v118 = vmul.f32 %v107, %v116
  %120 = vrot.lane.b32.xlu0 %v118, 2
  %v121 = vpop.permute.xlu0 %120
  %vm123 = vcmask 343056
  %124 = vst.msk [vmem:[#allocation2] sm:$0xff] %vm123, %v121
  %vm125 = vcmask 326656
  %126 = vst.msk [vmem:[#allocation3] sm:$0xff] %vm125, 0.0
  %127 = vst.msk [vmem:[#allocation3 + $0x8] sm:$0xff] %vm125, 0.0
  %v128 = vld [vmem:[#allocation2] sm:$0xff]
  %130 = vrot.lane.b32.xlu0 %v128, 127
  %v131 = vpop.permute.xlu0 %130
  %132 = vrot.lane.b32.xlu0 %v128, 126
  %v133 = vpop.permute.xlu0 %132
  %v134 = vld [vmem:[%s3] sm:$0xff]
  %v135 = vld [vmem:[%s3 + $0x8] sm:$0xff]
  %136 = vrot.lane.b32.xlu0 %v131, 127
  %v137 = vpop.permute.xlu0 %136
  %138 = vrot.lane.b32.xlu0 %v133, 127
  %v139 = vpop.permute.xlu0 %138
  %vm143 = vcmask 195584
  %v145 = vsel %vm143, %v134, 0
  %v148 = vsel %vm143, %v135, 0
  %150 = vmatprep.subr.mxu0 0.0
  %151 = vmatpush1.msra.mxu0 0.0
  %152 = vmatprep.subr.mxu0 0.0
  %153 = vmatpush1.msra.mxu0 0.0
  %154 = vmatprep.subr.mxu0 0.0
  %155 = vmatpush1.msra.mxu0 0.0
  %156 = vmatprep.subr.mxu0 0.0
  %157 = vmatpush1.msra.mxu0 0.0
  %158 = vmatprep.subr.mxu0 0.0
  %159 = vmatpush1.msra.mxu0 0.0
  %160 = vmatprep.subr.mxu0 0.0
  %161 = vmatpush1.msra.mxu0 0.0
  %162 = vmatprep.subr.mxu0 0.0
  %163 = vmatpush1.msra.mxu0 0.0
  %164 = vmatprep.subr.mxu0 0.0
  %165 = vmatpush1.msra.mxu0 0.0
  %166 = vmatprep.subr.mxu0 0.0
  %167 = vmatpush1.msra.mxu0 0.0
  %168 = vmatprep.subr.mxu0 0.0
  %169 = vmatpush1.msra.mxu0 0.0
  %170 = vmatprep.subr.mxu0 0.0
  %171 = vmatpush1.msra.mxu0 0.0
  %172 = vmatprep.subr.mxu0 0.0
  %173 = vmatpush1.msra.mxu0 0.0
  %174 = vmatprep.subr.mxu0 0.0
  %175 = vmatpush1.msra.mxu0 0.0
  %176 = vmatprep.subr.mxu0 0.0
  %177 = vmatpush1.msra.mxu0 %v139
  %178 = vmatprep.subr.mxu0 0.0
  %179 = vmatpush1.msra.mxu0 %v137
  %180 = vmatprep.subr.mxu0 0.0
  %181 = vmatpush1.msra.mxu0 %v131
  %182 = vmatprep.subr.mxu0 0.0
  %183 = vmatpush2.msra.mxu0 0.0
  %184 = vmatprep.subr.mxu0 0.0
  %185 = vmatpush2.msra.mxu0 0.0
  %186 = vmatprep.subr.mxu0 0.0
  %187 = vmatpush2.msra.mxu0 0.0
  %188 = vmatprep.subr.mxu0 0.0
  %189 = vmatpush2.msra.mxu0 0.0
  %190 = vmatprep.subr.mxu0 0.0
  %191 = vmatpush2.msra.mxu0 0.0
  %192 = vmatprep.subr.mxu0 0.0
  %193 = vmatpush2.msra.mxu0 0.0
  %194 = vmatprep.subr.mxu0 0.0
  %195 = vmatpush2.msra.mxu0 0.0
  %196 = vmatprep.subr.mxu0 0.0
  %197 = vmatpush2.msra.mxu0 0.0
  %198 = vmatprep.subr.mxu0 0.0
  %199 = vmatpush2.msra.mxu0 0.0
  %200 = vmatprep.subr.mxu0 0.0
  %201 = vmatpush2.msra.mxu0 0.0
  %202 = vmatprep.subr.mxu0 0.0
  %203 = vmatpush2.msra.mxu0 0.0
  %204 = vmatprep.subr.mxu0 0.0
  %205 = vmatpush2.msra.mxu0 0.0
  %206 = vmatprep.subr.mxu0 0.0
  %207 = vmatpush2.msra.mxu0 0.0
  %208 = vmatprep.subr.mxu0 0.0
  %209 = vmatpush2.msra.mxu0 0.0
  %210 = vmatprep.subr.mxu0 0.0
  %211 = vmatpush2.msra.mxu0 0.0
  %212 = vmatprep.subr.mxu0 0.0
  %213 = vmatpush2.msra.mxu0 0.0
  %214 = vmatprep.mubr.f32.mxu0 0.0
  %215 = vmatmul.mubr.f32.gmra.mxu0 %v145
  %v216 = vpop.f32.mrf.mxu0
  %v217 = vadd.f32 0.0, %v216
  %v218 = vpop.f32.mrf.mxu0
  %219 = vmatprep.mubr.f32.mxu0 0.0
  %220 = vmatmul.mubr.f32.gmra.mxu0 %v148
  %v221 = vpop.f32.mrf.mxu0
  %v222 = vadd.f32 0.0, %v221
  %v223 = vpop.f32.mrf.mxu0
  %224 = vdwg.mxu0
  %v225 = vtanh.pop %v217
  %v226 = vxor.u32 %v222, 2147483648
  %v227 = vmul.f32 %v226, 1.442695
  %v228 = vpow.pop %v227
  %v229 = vadd.f32 %v228, 1.0
  %v230 = vrcp.pop %v229
  %v231 = vmul.f32 1.0, %v230
  %v232 = vmul.f32 %v225, %v231
  %v233 = vmul.f32 %v232, %v116
  %v234 = vld [vmem:[#allocation3] sm:$0xff]
  %v235 = vld [vmem:[#allocation3 + $0x8] sm:$0xff]
  %v236 = vld [vmem:[%s5] sm:$0xff]
  %v237 = vld [vmem:[%s5 + $0x8] sm:$0xff]
  %vm238 = vcmask 64512
  %v240 = vsel %vm238, %v236, 0
  %v243 = vsel %vm238, %v237, 0
  %245 = vmatprep.subr.mxu0 0.0
  %246 = vmatpush1.msra.mxu0 0.0
  %247 = vmatprep.subr.mxu0 0.0
  %248 = vmatpush1.msra.mxu0 0.0
  %249 = vmatprep.subr.mxu0 0.0
  %250 = vmatpush1.msra.mxu0 0.0
  %251 = vmatprep.subr.mxu0 0.0
  %252 = vmatpush1.msra.mxu0 0.0
  %253 = vmatprep.subr.mxu0 0.0
  %254 = vmatpush1.msra.mxu0 0.0
  %255 = vmatprep.subr.mxu0 0.0
  %256 = vmatpush1.msra.mxu0 0.0
  %257 = vmatprep.subr.mxu0 0.0
  %258 = vmatpush1.msra.mxu0 0.0
  %259 = vmatprep.subr.mxu0 0.0
  %260 = vmatpush1.msra.mxu0 0.0
  %261 = vmatprep.subr.mxu0 0.0
  %262 = vmatpush1.msra.mxu0 0.0
  %263 = vmatprep.subr.mxu0 0.0
  %264 = vmatpush1.msra.mxu0 0.0
  %265 = vmatprep.subr.mxu0 0.0
  %266 = vmatpush1.msra.mxu0 0.0
  %267 = vmatprep.subr.mxu0 0.0
  %268 = vmatpush1.msra.mxu0 0.0
  %269 = vmatprep.subr.mxu0 0.0
  %270 = vmatpush1.msra.mxu0 0.0
  %271 = vmatprep.subr.mxu0 0.0
  %272 = vmatpush1.msra.mxu0 0.0
  %273 = vmatprep.subr.mxu0 0.0
  %274 = vmatpush1.msra.mxu0 0.0
  %275 = vmatprep.subr.mxu0 0.0
  %276 = vmatpush1.msra.mxu0 %v233
  %277 = vmatprep.subr.mxu0 0.0
  %278 = vmatpush2.msra.mxu0 0.0
  %279 = vmatprep.subr.mxu0 0.0
  %280 = vmatpush2.msra.mxu0 0.0
  %281 = vmatprep.subr.mxu0 0.0
  %282 = vmatpush2.msra.mxu0 0.0
  %283 = vmatprep.subr.mxu0 0.0
  %284 = vmatpush2.msra.mxu0 0.0
  %285 = vmatprep.subr.mxu0 0.0
  %286 = vmatpush2.msra.mxu0 0.0
  %287 = vmatprep.subr.mxu0 0.0
  %288 = vmatpush2.msra.mxu0 0.0
  %289 = vmatprep.subr.mxu0 0.0
  %290 = vmatpush2.msra.mxu0 0.0
  %291 = vmatprep.subr.mxu0 0.0
  %292 = vmatpush2.msra.mxu0 0.0
  %293 = vmatprep.subr.mxu0 0.0
  %294 = vmatpush2.msra.mxu0 0.0
  %295 = vmatprep.subr.mxu0 0.0
  %296 = vmatpush2.msra.mxu0 0.0
  %297 = vmatprep.subr.mxu0 0.0
  %298 = vmatpush2.msra.mxu0 0.0
  %299 = vmatprep.subr.mxu0 0.0
  %300 = vmatpush2.msra.mxu0 0.0
  %301 = vmatprep.subr.mxu0 0.0
  %302 = vmatpush2.msra.mxu0 0.0
  %303 = vmatprep.subr.mxu0 0.0
  %304 = vmatpush2.msra.mxu0 0.0
  %305 = vmatprep.subr.mxu0 0.0
  %306 = vmatpush2.msra.mxu0 0.0
  %307 = vmatprep.subr.mxu0 0.0
  %308 = vmatpush2.msra.mxu0 0.0
  %309 = vmatprep.mubr.f32.mxu0 0.0
  %310 = vmatmul.mubr.f32.gmra.mxu0 %v240
  %v311 = vpop.f32.mrf.mxu0
  %v312 = vadd.f32 0.0, %v311
  %v313 = vpop.f32.mrf.mxu0
  %314 = vmatprep.mubr.f32.mxu0 0.0
  %315 = vmatmul.mubr.f32.gmra.mxu0 %v243
  %v316 = vpop.f32.mrf.mxu0
  %v317 = vadd.f32 0.0, %v316
  %v318 = vpop.f32.mrf.mxu0
  %319 = vdwg.mxu0
  %v320 = vadd.f32 %v234, %v312
  %v321 = vadd.f32 %v235, %v317
  %322 = vst.msk [vmem:[#allocation3] sm:$0xff] %vm125, %v320
  %323 = vst.msk [vmem:[#allocation3 + $0x8] sm:$0xff] %vm125, %v321
  %v324 = vld [vmem:[%s4] sm:$0xff]
  %v327 = vsel %vm238, %v324, 0
  %329 = vmatprep.subr.mxu0 0.0
  %330 = vmatpush1.msra.mxu0 0.0
  %331 = vmatprep.subr.mxu0 0.0
  %332 = vmatpush1.msra.mxu0 0.0
  %333 = vmatprep.subr.mxu0 0.0
  %334 = vmatpush1.msra.mxu0 0.0
  %335 = vmatprep.subr.mxu0 0.0
  %336 = vmatpush1.msra.mxu0 0.0
  %337 = vmatprep.subr.mxu0 0.0
  %338 = vmatpush1.msra.mxu0 0.0
  %339 = vmatprep.subr.mxu0 0.0
  %340 = vmatpush1.msra.mxu0 0.0
  %341 = vmatprep.subr.mxu0 0.0
  %342 = vmatpush1.msra.mxu0 0.0
  %343 = vmatprep.subr.mxu0 0.0
  %344 = vmatpush1.msra.mxu0 0.0
  %345 = vmatprep.subr.mxu0 0.0
  %346 = vmatpush1.msra.mxu0 0.0
  %347 = vmatprep.subr.mxu0 0.0
  %348 = vmatpush1.msra.mxu0 0.0
  %349 = vmatprep.subr.mxu0 0.0
  %350 = vmatpush1.msra.mxu0 0.0
  %351 = vmatprep.subr.mxu0 0.0
  %352 = vmatpush1.msra.mxu0 0.0
  %353 = vmatprep.subr.mxu0 0.0
  %354 = vmatpush1.msra.mxu0 0.0
  %355 = vmatprep.subr.mxu0 0.0
  %356 = vmatpush1.msra.mxu0 0.0
  %357 = vmatprep.subr.mxu0 0.0
  %358 = vmatpush1.msra.mxu0 0.0
  %359 = vmatprep.subr.mxu0 0.0
  %360 = vmatpush1.msra.mxu0 %v233
  %361 = vmatprep.subr.mxu0 0.0
  %362 = vmatpush2.msra.mxu0 0.0
  %363 = vmatprep.subr.mxu0 0.0
  %364 = vmatpush2.msra.mxu0 0.0
  %365 = vmatprep.subr.mxu0 0.0
  %366 = vmatpush2.msra.mxu0 0.0
  %367 = vmatprep.subr.mxu0 0.0
  %368 = vmatpush2.msra.mxu0 0.0
  %369 = vmatprep.subr.mxu0 0.0
  %370 = vmatpush2.msra.mxu0 0.0
  %371 = vmatprep.subr.mxu0 0.0
  %372 = vmatpush2.msra.mxu0 0.0
  %373 = vmatprep.subr.mxu0 0.0
  %374 = vmatpush2.msra.mxu0 0.0
  %375 = vmatprep.subr.mxu0 0.0
  %376 = vmatpush2.msra.mxu0 0.0
  %377 = vmatprep.subr.mxu0 0.0
  %378 = vmatpush2.msra.mxu0 0.0
  %379 = vmatprep.subr.mxu0 0.0
  %380 = vmatpush2.msra.mxu0 0.0
  %381 = vmatprep.subr.mxu0 0.0
  %382 = vmatpush2.msra.mxu0 0.0
  %383 = vmatprep.subr.mxu0 0.0
  %384 = vmatpush2.msra.mxu0 0.0
  %385 = vmatprep.subr.mxu0 0.0
  %386 = vmatpush2.msra.mxu0 0.0
  %387 = vmatprep.subr.mxu0 0.0
  %388 = vmatpush2.msra.mxu0 0.0
  %389 = vmatprep.subr.mxu0 0.0
  %390 = vmatpush2.msra.mxu0 0.0
  %391 = vmatprep.subr.mxu0 0.0
  %392 = vmatpush2.msra.mxu0 0.0
  %393 = vmatprep.mubr.f32.mxu0 0.0
  %394 = vmatmul.mubr.f32.gmra.mxu0 %v327
  %v395 = vpop.f32.mrf.mxu0
  %v396 = vadd.f32 %v133, %v395
  %v397 = vpop.f32.mrf.mxu0
  %398 = vdwg.mxu0
  %400 = vrot.lane.b32.xlu0 %v396, 2
  %v401 = vpop.permute.xlu0 %400
  %403 = vst.msk [vmem:[#allocation2] sm:$0xff] %vm123, %v401
  %v404 = vld [vmem:[#allocation2] sm:$0xff]
  %406 = vrot.lane.b32.xlu0 %v404, 126
  %v407 = vpop.permute.xlu0 %406
  %409 = vrot.lane.b32.xlu0 %v404, 124
  %v410 = vpop.permute.xlu0 %409
  %s412 = scalar_lea.vmem %s3, 16
  %v413 = vld [vmem:[%s412] sm:$0xff]
  %v414 = vld [vmem:[%s412 + $0x8] sm:$0xff]
  %v416 = vsel %vm143, %v413, 0
  %v419 = vsel %vm143, %v414, 0
  %421 = vmatprep.subr.mxu0 0.0
  %422 = vmatpush1.msra.mxu0 0.0
  %423 = vmatprep.subr.mxu0 0.0
  %424 = vmatpush1.msra.mxu0 0.0
  %425 = vmatprep.subr.mxu0 0.0
  %426 = vmatpush1.msra.mxu0 0.0
  %427 = vmatprep.subr.mxu0 0.0
  %428 = vmatpush1.msra.mxu0 0.0
  %429 = vmatprep.subr.mxu0 0.0
  %430 = vmatpush1.msra.mxu0 0.0
  %431 = vmatprep.subr.mxu0 0.0
  %432 = vmatpush1.msra.mxu0 0.0
  %433 = vmatprep.subr.mxu0 0.0
  %434 = vmatpush1.msra.mxu0 0.0
  %435 = vmatprep.subr.mxu0 0.0
  %436 = vmatpush1.msra.mxu0 0.0
  %437 = vmatprep.subr.mxu0 0.0
  %438 = vmatpush1.msra.mxu0 0.0
  %439 = vmatprep.subr.mxu0 0.0
  %440 = vmatpush1.msra.mxu0 0.0
  %441 = vmatprep.subr.mxu0 0.0
  %442 = vmatpush1.msra.mxu0 0.0
  %443 = vmatprep.subr.mxu0 0.0
  %444 = vmatpush1.msra.mxu0 0.0
  %445 = vmatprep.subr.mxu0 0.0
  %446 = vmatpush1.msra.mxu0 0.0
  %447 = vmatprep.subr.mxu0 0.0
  %448 = vmatpush1.msra.mxu0 %v410
  %449 = vmatprep.subr.mxu0 0.0
  %450 = vmatpush1.msra.mxu0 %v407
  %451 = vmatprep.subr.mxu0 0.0
  %452 = vmatpush1.msra.mxu0 %v404
  %453 = vmatprep.subr.mxu0 0.0
  %454 = vmatpush2.msra.mxu0 0.0
  %455 = vmatprep.subr.mxu0 0.0
  %456 = vmatpush2.msra.mxu0 0.0
  %457 = vmatprep.subr.mxu0 0.0
  %458 = vmatpush2.msra.mxu0 0.0
  %459 = vmatprep.subr.mxu0 0.0
  %460 = vmatpush2.msra.mxu0 0.0
  %461 = vmatprep.subr.mxu0 0.0
  %462 = vmatpush2.msra.mxu0 0.0
  %463 = vmatprep.subr.mxu0 0.0
  %464 = vmatpush2.msra.mxu0 0.0
  %465 = vmatprep.subr.mxu0 0.0
  %466 = vmatpush2.msra.mxu0 0.0
  %467 = vmatprep.subr.mxu0 0.0
  %468 = vmatpush2.msra.mxu0 0.0
  %469 = vmatprep.subr.mxu0 0.0
  %470 = vmatpush2.msra.mxu0 0.0
  %471 = vmatprep.subr.mxu0 0.0
  %472 = vmatpush2.msra.mxu0 0.0
  %473 = vmatprep.subr.mxu0 0.0
  %474 = vmatpush2.msra.mxu0 0.0
  %475 = vmatprep.subr.mxu0 0.0
  %476 = vmatpush2.msra.mxu0 0.0
  %477 = vmatprep.subr.mxu0 0.0
  %478 = vmatpush2.msra.mxu0 0.0
  %479 = vmatprep.subr.mxu0 0.0
  %480 = vmatpush2.msra.mxu0 0.0
  %481 = vmatprep.subr.mxu0 0.0
  %482 = vmatpush2.msra.mxu0 0.0
  %483 = vmatprep.subr.mxu0 0.0
  %484 = vmatpush2.msra.mxu0 0.0
  %485 = vmatprep.mubr.f32.mxu0 0.0
  %486 = vmatmul.mubr.f32.gmra.mxu0 %v416
  %v487 = vpop.f32.mrf.mxu0
  %v488 = vadd.f32 0.0, %v487
  %v489 = vpop.f32.mrf.mxu0
  %490 = vmatprep.mubr.f32.mxu0 0.0
  %491 = vmatmul.mubr.f32.gmra.mxu0 %v419
  %v492 = vpop.f32.mrf.mxu0
  %v493 = vadd.f32 0.0, %v492
  %v494 = vpop.f32.mrf.mxu0
  %495 = vdwg.mxu0
  %v496 = vtanh.pop %v488
  %v497 = vxor.u32 %v493, 2147483648
  %v498 = vmul.f32 %v497, 1.442695
  %v499 = vpow.pop %v498
  %v500 = vadd.f32 %v499, 1.0
  %v501 = vrcp.pop %v500
  %v502 = vmul.f32 1.0, %v501
  %v503 = vmul.f32 %v496, %v502
  %v504 = vmul.f32 %v503, %v116
  %v505 = vld [vmem:[#allocation3] sm:$0xff]
  %v506 = vld [vmem:[#allocation3 + $0x8] sm:$0xff]
  %s507 = scalar_lea.vmem %s5, 16
  %v508 = vld [vmem:[%s507] sm:$0xff]
  %v509 = vld [vmem:[%s507 + $0x8] sm:$0xff]
  %v511 = vsel %vm238, %v508, 0
  %v514 = vsel %vm238, %v509, 0
  %516 = vmatprep.subr.mxu0 0.0
  %517 = vmatpush1.msra.mxu0 0.0
  %518 = vmatprep.subr.mxu0 0.0
  %519 = vmatpush1.msra.mxu0 0.0
  %520 = vmatprep.subr.mxu0 0.0
  %521 = vmatpush1.msra.mxu0 0.0
  %522 = vmatprep.subr.mxu0 0.0
  %523 = vmatpush1.msra.mxu0 0.0
  %524 = vmatprep.subr.mxu0 0.0
  %525 = vmatpush1.msra.mxu0 0.0
  %526 = vmatprep.subr.mxu0 0.0
  %527 = vmatpush1.msra.mxu0 0.0
  %528 = vmatprep.subr.mxu0 0.0
  %529 = vmatpush1.msra.mxu0 0.0
  %530 = vmatprep.subr.mxu0 0.0
  %531 = vmatpush1.msra.mxu0 0.0
  %532 = vmatprep.subr.mxu0 0.0
  %533 = vmatpush1.msra.mxu0 0.0
  %534 = vmatprep.subr.mxu0 0.0
  %535 = vmatpush1.msra.mxu0 0.0
  %536 = vmatprep.subr.mxu0 0.0
  %537 = vmatpush1.msra.mxu0 0.0
  %538 = vmatprep.subr.mxu0 0.0
  %539 = vmatpush1.msra.mxu0 0.0
  %540 = vmatprep.subr.mxu0 0.0
  %541 = vmatpush1.msra.mxu0 0.0
  %542 = vmatprep.subr.mxu0 0.0
  %543 = vmatpush1.msra.mxu0 0.0
  %544 = vmatprep.subr.mxu0 0.0
  %545 = vmatpush1.msra.mxu0 0.0
  %546 = vmatprep.subr.mxu0 0.0
  %547 = vmatpush1.msra.mxu0 %v504
  %548 = vmatprep.subr.mxu0 0.0
  %549 = vmatpush2.msra.mxu0 0.0
  %550 = vmatprep.subr.mxu0 0.0
  %551 = vmatpush2.msra.mxu0 0.0
  %552 = vmatprep.subr.mxu0 0.0
  %553 = vmatpush2.msra.mxu0 0.0
  %554 = vmatprep.subr.mxu0 0.0
  %555 = vmatpush2.msra.mxu0 0.0
  %556 = vmatprep.subr.mxu0 0.0
  %557 = vmatpush2.msra.mxu0 0.0
  %558 = vmatprep.subr.mxu0 0.0
  %559 = vmatpush2.msra.mxu0 0.0
  %560 = vmatprep.subr.mxu0 0.0
  %561 = vmatpush2.msra.mxu0 0.0
  %562 = vmatprep.subr.mxu0 0.0
  %563 = vmatpush2.msra.mxu0 0.0
  %564 = vmatprep.subr.mxu0 0.0
  %565 = vmatpush2.msra.mxu0 0.0
  %566 = vmatprep.subr.mxu0 0.0
  %567 = vmatpush2.msra.mxu0 0.0
  %568 = vmatprep.subr.mxu0 0.0
  %569 = vmatpush2.msra.mxu0 0.0
  %570 = vmatprep.subr.mxu0 0.0
  %571 = vmatpush2.msra.mxu0 0.0
  %572 = vmatprep.subr.mxu0 0.0
  %573 = vmatpush2.msra.mxu0 0.0
  %574 = vmatprep.subr.mxu0 0.0
  %575 = vmatpush2.msra.mxu0 0.0
  %576 = vmatprep.subr.mxu0 0.0
  %577 = vmatpush2.msra.mxu0 0.0
  %578 = vmatprep.subr.mxu0 0.0
  %579 = vmatpush2.msra.mxu0 0.0
  %580 = vmatprep.mubr.f32.mxu0 0.0
  %581 = vmatmul.mubr.f32.gmra.mxu0 %v511
  %v582 = vpop.f32.mrf.mxu0
  %v583 = vadd.f32 0.0, %v582
  %v584 = vpop.f32.mrf.mxu0
  %585 = vmatprep.mubr.f32.mxu0 0.0
  %586 = vmatmul.mubr.f32.gmra.mxu0 %v514
  %v587 = vpop.f32.mrf.mxu0
  %v588 = vadd.f32 0.0, %v587
  %v589 = vpop.f32.mrf.mxu0
  %590 = vdwg.mxu0
  %v591 = vadd.f32 %v505, %v583
  %v592 = vadd.f32 %v506, %v588
  %593 = vst.msk [vmem:[#allocation3] sm:$0xff] %vm125, %v591
  %594 = vst.msk [vmem:[#allocation3 + $0x8] sm:$0xff] %vm125, %v592
  %s595 = scalar_lea.vmem %s4, 8
  %v596 = vld [vmem:[%s595] sm:$0xff]
  %v598 = vsel %vm238, %v596, 0
  %600 = vmatprep.subr.mxu0 0.0
  %601 = vmatpush1.msra.mxu0 0.0
  %602 = vmatprep.subr.mxu0 0.0
  %603 = vmatpush1.msra.mxu0 0.0
  %604 = vmatprep.subr.mxu0 0.0
  %605 = vmatpush1.msra.mxu0 0.0
  %606 = vmatprep.subr.mxu0 0.0
  %607 = vmatpush1.msra.mxu0 0.0
  %608 = vmatprep.subr.mxu0 0.0
  %609 = vmatpush1.msra.mxu0 0.0
  %610 = vmatprep.subr.mxu0 0.0
  %611 = vmatpush1.msra.mxu0 0.0
  %612 = vmatprep.subr.mxu0 0.0
  %613 = vmatpush1.msra.mxu0 0.0
  %614 = vmatprep.subr.mxu0 0.0
  %615 = vmatpush1.msra.mxu0 0.0
  %616 = vmatprep.subr.mxu0 0.0
  %617 = vmatpush1.msra.mxu0 0.0
  %618 = vmatprep.subr.mxu0 0.0
  %619 = vmatpush1.msra.mxu0 0.0
  %620 = vmatprep.subr.mxu0 0.0
  %621 = vmatpush1.msra.mxu0 0.0
  %622 = vmatprep.subr.mxu0 0.0
  %623 = vmatpush1.msra.mxu0 0.0
  %624 = vmatprep.subr.mxu0 0.0
  %625 = vmatpush1.msra.mxu0 0.0
  %626 = vmatprep.subr.mxu0 0.0
  %627 = vmatpush1.msra.mxu0 0.0
  %628 = vmatprep.subr.mxu0 0.0
  %629 = vmatpush1.msra.mxu0 0.0
  %630 = vmatprep.subr.mxu0 0.0
  %631 = vmatpush1.msra.mxu0 %v504
  %632 = vmatprep.subr.mxu0 0.0
  %633 = vmatpush2.msra.mxu0 0.0
  %634 = vmatprep.subr.mxu0 0.0
  %635 = vmatpush2.msra.mxu0 0.0
  %636 = vmatprep.subr.mxu0 0.0
  %637 = vmatpush2.msra.mxu0 0.0
  %638 = vmatprep.subr.mxu0 0.0
  %639 = vmatpush2.msra.mxu0 0.0
  %640 = vmatprep.subr.mxu0 0.0
  %641 = vmatpush2.msra.mxu0 0.0
  %642 = vmatprep.subr.mxu0 0.0
  %643 = vmatpush2.msra.mxu0 0.0
  %644 = vmatprep.subr.mxu0 0.0
  %645 = vmatpush2.msra.mxu0 0.0
  %646 = vmatprep.subr.mxu0 0.0
  %647 = vmatpush2.msra.mxu0 0.0
  %648 = vmatprep.subr.mxu0 0.0
  %649 = vmatpush2.msra.mxu0 0.0
  %650 = vmatprep.subr.mxu0 0.0
  %651 = vmatpush2.msra.mxu0 0.0
  %652 = vmatprep.subr.mxu0 0.0
  %653 = vmatpush2.msra.mxu0 0.0
  %654 = vmatprep.subr.mxu0 0.0
  %655 = vmatpush2.msra.mxu0 0.0
  %656 = vmatprep.subr.mxu0 0.0
  %657 = vmatpush2.msra.mxu0 0.0
  %658 = vmatprep.subr.mxu0 0.0
  %659 = vmatpush2.msra.mxu0 0.0
  %660 = vmatprep.subr.mxu0 0.0
  %661 = vmatpush2.msra.mxu0 0.0
  %662 = vmatprep.subr.mxu0 0.0
  %663 = vmatpush2.msra.mxu0 0.0
  %664 = vmatprep.mubr.f32.mxu0 0.0
  %665 = vmatmul.mubr.f32.gmra.mxu0 %v598
  %v666 = vpop.f32.mrf.mxu0
  %v667 = vadd.f32 %v407, %v666
  %v668 = vpop.f32.mrf.mxu0
  %669 = vdwg.mxu0
  %671 = vrot.lane.b32.xlu0 %v667, 2
  %v672 = vpop.permute.xlu0 %671
  %674 = vst.msk [vmem:[#allocation2] sm:$0xff] %vm123, %v672
  %v675 = vld [vmem:[#allocation2] sm:$0xff]
  %677 = vrot.lane.b32.xlu0 %v675, 127
  %v678 = vpop.permute.xlu0 %677
  %679 = vrot.lane.b32.xlu0 %v675, 126
  %v680 = vpop.permute.xlu0 %679
  %s681 = scalar_lea.vmem %s3, 32
  %v682 = vld [vmem:[%s681] sm:$0xff]
  %v683 = vld [vmem:[%s681 + $0x8] sm:$0xff]
  %684 = vrot.lane.b32.xlu0 %v678, 127
  %v685 = vpop.permute.xlu0 %684
  %686 = vrot.lane.b32.xlu0 %v680, 127
  %v687 = vpop.permute.xlu0 %686
  %v692 = vsel %vm143, %v682, 0
  %v695 = vsel %vm143, %v683, 0
  %697 = vmatprep.subr.mxu0 0.0
  %698 = vmatpush1.msra.mxu0 0.0
  %699 = vmatprep.subr.mxu0 0.0
  %700 = vmatpush1.msra.mxu0 0.0
  %701 = vmatprep.subr.mxu0 0.0
  %702 = vmatpush1.msra.mxu0 0.0
  %703 = vmatprep.subr.mxu0 0.0
  %704 = vmatpush1.msra.mxu0 0.0
  %705 = vmatprep.subr.mxu0 0.0
  %706 = vmatpush1.msra.mxu0 0.0
  %707 = vmatprep.subr.mxu0 0.0
  %708 = vmatpush1.msra.mxu0 0.0
  %709 = vmatprep.subr.mxu0 0.0
  %710 = vmatpush1.msra.mxu0 0.0
  %711 = vmatprep.subr.mxu0 0.0
  %712 = vmatpush1.msra.mxu0 0.0
  %713 = vmatprep.subr.mxu0 0.0
  %714 = vmatpush1.msra.mxu0 0.0
  %715 = vmatprep.subr.mxu0 0.0
  %716 = vmatpush1.msra.mxu0 0.0
  %717 = vmatprep.subr.mxu0 0.0
  %718 = vmatpush1.msra.mxu0 0.0
  %719 = vmatprep.subr.mxu0 0.0
  %720 = vmatpush1.msra.mxu0 0.0
  %721 = vmatprep.subr.mxu0 0.0
  %722 = vmatpush1.msra.mxu0 0.0
  %723 = vmatprep.subr.mxu0 0.0
  %724 = vmatpush1.msra.mxu0 %v687
  %725 = vmatprep.subr.mxu0 0.0
  %726 = vmatpush1.msra.mxu0 %v685
  %727 = vmatprep.subr.mxu0 0.0
  %728 = vmatpush1.msra.mxu0 %v678
  %729 = vmatprep.subr.mxu0 0.0
  %730 = vmatpush2.msra.mxu0 0.0
  %731 = vmatprep.subr.mxu0 0.0
  %732 = vmatpush2.msra.mxu0 0.0
  %733 = vmatprep.subr.mxu0 0.0
  %734 = vmatpush2.msra.mxu0 0.0
  %735 = vmatprep.subr.mxu0 0.0
  %736 = vmatpush2.msra.mxu0 0.0
  %737 = vmatprep.subr.mxu0 0.0
  %738 = vmatpush2.msra.mxu0 0.0
  %739 = vmatprep.subr.mxu0 0.0
  %740 = vmatpush2.msra.mxu0 0.0
  %741 = vmatprep.subr.mxu0 0.0
  %742 = vmatpush2.msra.mxu0 0.0
  %743 = vmatprep.subr.mxu0 0.0
  %744 = vmatpush2.msra.mxu0 0.0
  %745 = vmatprep.subr.mxu0 0.0
  %746 = vmatpush2.msra.mxu0 0.0
  %747 = vmatprep.subr.mxu0 0.0
  %748 = vmatpush2.msra.mxu0 0.0
  %749 = vmatprep.subr.mxu0 0.0
  %750 = vmatpush2.msra.mxu0 0.0
  %751 = vmatprep.subr.mxu0 0.0
  %752 = vmatpush2.msra.mxu0 0.0
  %753 = vmatprep.subr.mxu0 0.0
  %754 = vmatpush2.msra.mxu0 0.0
  %755 = vmatprep.subr.mxu0 0.0
  %756 = vmatpush2.msra.mxu0 0.0
  %757 = vmatprep.subr.mxu0 0.0
  %758 = vmatpush2.msra.mxu0 0.0
  %759 = vmatprep.subr.mxu0 0.0
  %760 = vmatpush2.msra.mxu0 0.0
  %761 = vmatprep.mubr.f32.mxu0 0.0
  %762 = vmatmul.mubr.f32.gmra.mxu0 %v692
  %v763 = vpop.f32.mrf.mxu0
  %v764 = vadd.f32 0.0, %v763
  %v765 = vpop.f32.mrf.mxu0
  %766 = vmatprep.mubr.f32.mxu0 0.0
  %767 = vmatmul.mubr.f32.gmra.mxu0 %v695
  %v768 = vpop.f32.mrf.mxu0
  %v769 = vadd.f32 0.0, %v768
  %v770 = vpop.f32.mrf.mxu0
  %771 = vdwg.mxu0
  %v772 = vtanh.pop %v764
  %v773 = vxor.u32 %v769, 2147483648
  %v774 = vmul.f32 %v773, 1.442695
  %v775 = vpow.pop %v774
  %v776 = vadd.f32 %v775, 1.0
  %v777 = vrcp.pop %v776
  %v778 = vmul.f32 1.0, %v777
  %v779 = vmul.f32 %v772, %v778
  %v780 = vmul.f32 %v779, %v116
  %v781 = vld [vmem:[#allocation3] sm:$0xff]
  %v782 = vld [vmem:[#allocation3 + $0x8] sm:$0xff]
  %s783 = scalar_lea.vmem %s5, 32
  %v784 = vld [vmem:[%s783] sm:$0xff]
  %v785 = vld [vmem:[%s783 + $0x8] sm:$0xff]
  %v787 = vsel %vm238, %v784, 0
  %v790 = vsel %vm238, %v785, 0
  %792 = vmatprep.subr.mxu0 0.0
  %793 = vmatpush1.msra.mxu0 0.0
  %794 = vmatprep.subr.mxu0 0.0
  %795 = vmatpush1.msra.mxu0 0.0
  %796 = vmatprep.subr.mxu0 0.0
  %797 = vmatpush1.msra.mxu0 0.0
  %798 = vmatprep.subr.mxu0 0.0
  %799 = vmatpush1.msra.mxu0 0.0
  %800 = vmatprep.subr.mxu0 0.0
  %801 = vmatpush1.msra.mxu0 0.0
  %802 = vmatprep.subr.mxu0 0.0
  %803 = vmatpush1.msra.mxu0 0.0
  %804 = vmatprep.subr.mxu0 0.0
  %805 = vmatpush1.msra.mxu0 0.0
  %806 = vmatprep.subr.mxu0 0.0
  %807 = vmatpush1.msra.mxu0 0.0
  %808 = vmatprep.subr.mxu0 0.0
  %809 = vmatpush1.msra.mxu0 0.0
  %810 = vmatprep.subr.mxu0 0.0
  %811 = vmatpush1.msra.mxu0 0.0
  %812 = vmatprep.subr.mxu0 0.0
  %813 = vmatpush1.msra.mxu0 0.0
  %814 = vmatprep.subr.mxu0 0.0
  %815 = vmatpush1.msra.mxu0 0.0
  %816 = vmatprep.subr.mxu0 0.0
  %817 = vmatpush1.msra.mxu0 0.0
  %818 = vmatprep.subr.mxu0 0.0
  %819 = vmatpush1.msra.mxu0 0.0
  %820 = vmatprep.subr.mxu0 0.0
  %821 = vmatpush1.msra.mxu0 0.0
  %822 = vmatprep.subr.mxu0 0.0
  %823 = vmatpush1.msra.mxu0 %v780
  %824 = vmatprep.subr.mxu0 0.0
  %825 = vmatpush2.msra.mxu0 0.0
  %826 = vmatprep.subr.mxu0 0.0
  %827 = vmatpush2.msra.mxu0 0.0
  %828 = vmatprep.subr.mxu0 0.0
  %829 = vmatpush2.msra.mxu0 0.0
  %830 = vmatprep.subr.mxu0 0.0
  %831 = vmatpush2.msra.mxu0 0.0
  %832 = vmatprep.subr.mxu0 0.0
  %833 = vmatpush2.msra.mxu0 0.0
  %834 = vmatprep.subr.mxu0 0.0
  %835 = vmatpush2.msra.mxu0 0.0
  %836 = vmatprep.subr.mxu0 0.0
  %837 = vmatpush2.msra.mxu0 0.0
  %838 = vmatprep.subr.mxu0 0.0
  %839 = vmatpush2.msra.mxu0 0.0
  %840 = vmatprep.subr.mxu0 0.0
  %841 = vmatpush2.msra.mxu0 0.0
  %842 = vmatprep.subr.mxu0 0.0
  %843 = vmatpush2.msra.mxu0 0.0
  %844 = vmatprep.subr.mxu0 0.0
  %845 = vmatpush2.msra.mxu0 0.0
  %846 = vmatprep.subr.mxu0 0.0
  %847 = vmatpush2.msra.mxu0 0.0
  %848 = vmatprep.subr.mxu0 0.0
  %849 = vmatpush2.msra.mxu0 0.0
  %850 = vmatprep.subr.mxu0 0.0
  %851 = vmatpush2.msra.mxu0 0.0
  %852 = vmatprep.subr.mxu0 0.0
  %853 = vmatpush2.msra.mxu0 0.0
  %854 = vmatprep.subr.mxu0 0.0
  %855 = vmatpush2.msra.mxu0 0.0
  %856 = vmatprep.mubr.f32.mxu0 0.0
  %857 = vmatmul.mubr.f32.gmra.mxu0 %v787
  %v858 = vpop.f32.mrf.mxu0
  %v859 = vadd.f32 0.0, %v858
  %v860 = vpop.f32.mrf.mxu0
  %861 = vmatprep.mubr.f32.mxu0 0.0
  %862 = vmatmul.mubr.f32.gmra.mxu0 %v790
  %v863 = vpop.f32.mrf.mxu0
  %v864 = vadd.f32 0.0, %v863
  %v865 = vpop.f32.mrf.mxu0
  %866 = vdwg.mxu0
  %v867 = vadd.f32 %v781, %v859
  %v868 = vadd.f32 %v782, %v864
  %869 = vst.msk [vmem:[#allocation3] sm:$0xff] %vm125, %v867
  %870 = vst.msk [vmem:[#allocation3 + $0x8] sm:$0xff] %vm125, %v868
  %s871 = scalar_lea.vmem %s4, 16
  %v872 = vld [vmem:[%s871] sm:$0xff]
  %v875 = vsel %vm238, %v872, 0
  %877 = vmatprep.subr.mxu0 0.0
  %878 = vmatpush1.msra.mxu0 0.0
  %879 = vmatprep.subr.mxu0 0.0
  %880 = vmatpush1.msra.mxu0 0.0
  %881 = vmatprep.subr.mxu0 0.0
  %882 = vmatpush1.msra.mxu0 0.0
  %883 = vmatprep.subr.mxu0 0.0
  %884 = vmatpush1.msra.mxu0 0.0
  %885 = vmatprep.subr.mxu0 0.0
  %886 = vmatpush1.msra.mxu0 0.0
  %887 = vmatprep.subr.mxu0 0.0
  %888 = vmatpush1.msra.mxu0 0.0
  %889 = vmatprep.subr.mxu0 0.0
  %890 = vmatpush1.msra.mxu0 0.0
  %891 = vmatprep.subr.mxu0 0.0
  %892 = vmatpush1.msra.mxu0 0.0
  %893 = vmatprep.subr.mxu0 0.0
  %894 = vmatpush1.msra.mxu0 0.0
  %895 = vmatprep.subr.mxu0 0.0
  %896 = vmatpush1.msra.mxu0 0.0
  %897 = vmatprep.subr.mxu0 0.0
  %898 = vmatpush1.msra.mxu0 0.0
  %899 = vmatprep.subr.mxu0 0.0
  %900 = vmatpush1.msra.mxu0 0.0
  %901 = vmatprep.subr.mxu0 0.0
  %902 = vmatpush1.msra.mxu0 0.0
  %903 = vmatprep.subr.mxu0 0.0
  %904 = vmatpush1.msra.mxu0 0.0
  %905 = vmatprep.subr.mxu0 0.0
  %906 = vmatpush1.msra.mxu0 0.0
  %907 = vmatprep.subr.mxu0 0.0
  %908 = vmatpush1.msra.mxu0 %v780
  %909 = vmatprep.subr.mxu0 0.0
  %910 = vmatpush2.msra.mxu0 0.0
  %911 = vmatprep.subr.mxu0 0.0
  %912 = vmatpush2.msra.mxu0 0.0
  %913 = vmatprep.subr.mxu0 0.0
  %914 = vmatpush2.msra.mxu0 0.0
  %915 = vmatprep.subr.mxu0 0.0
  %916 = vmatpush2.msra.mxu0 0.0
  %917 = vmatprep.subr.mxu0 0.0
  %918 = vmatpush2.msra.mxu0 0.0
  %919 = vmatprep.subr.mxu0 0.0
  %920 = vmatpush2.msra.mxu0 0.0
  %921 = vmatprep.subr.mxu0 0.0
  %922 = vmatpush2.msra.mxu0 0.0
  %923 = vmatprep.subr.mxu0 0.0
  %924 = vmatpush2.msra.mxu0 0.0
  %925 = vmatprep.subr.mxu0 0.0
  %926 = vmatpush2.msra.mxu0 0.0
  %927 = vmatprep.subr.mxu0 0.0
  %928 = vmatpush2.msra.mxu0 0.0
  %929 = vmatprep.subr.mxu0 0.0
  %930 = vmatpush2.msra.mxu0 0.0
  %931 = vmatprep.subr.mxu0 0.0
  %932 = vmatpush2.msra.mxu0 0.0
  %933 = vmatprep.subr.mxu0 0.0
  %934 = vmatpush2.msra.mxu0 0.0
  %935 = vmatprep.subr.mxu0 0.0
  %936 = vmatpush2.msra.mxu0 0.0
  %937 = vmatprep.subr.mxu0 0.0
  %938 = vmatpush2.msra.mxu0 0.0
  %939 = vmatprep.subr.mxu0 0.0
  %940 = vmatpush2.msra.mxu0 0.0
  %941 = vmatprep.mubr.f32.mxu0 0.0
  %942 = vmatmul.mubr.f32.gmra.mxu0 %v875
  %v943 = vpop.f32.mrf.mxu0
  %v944 = vadd.f32 %v680, %v943
  %v945 = vpop.f32.mrf.mxu0
  %946 = vdwg.mxu0
  %948 = vrot.lane.b32.xlu0 %v944, 2
  %v949 = vpop.permute.xlu0 %948
  %951 = vst.msk [vmem:[#allocation2] sm:$0xff] %vm123, %v949
  %v952 = vld [vmem:[#allocation2] sm:$0xff]
  %954 = vrot.lane.b32.xlu0 %v952, 126
  %v955 = vpop.permute.xlu0 %954
  %957 = vrot.lane.b32.xlu0 %v952, 124
  %v958 = vpop.permute.xlu0 %957
  %s960 = scalar_lea.vmem %s3, 48
  %v961 = vld [vmem:[%s960] sm:$0xff]
  %v962 = vld [vmem:[%s960 + $0x8] sm:$0xff]
  %v964 = vsel %vm143, %v961, 0
  %v967 = vsel %vm143, %v962, 0
  %969 = vmatprep.subr.mxu0 0.0
  %970 = vmatpush1.msra.mxu0 0.0
  %971 = vmatprep.subr.mxu0 0.0
  %972 = vmatpush1.msra.mxu0 0.0
  %973 = vmatprep.subr.mxu0 0.0
  %974 = vmatpush1.msra.mxu0 0.0
  %975 = vmatprep.subr.mxu0 0.0
  %976 = vmatpush1.msra.mxu0 0.0
  %977 = vmatprep.subr.mxu0 0.0
  %978 = vmatpush1.msra.mxu0 0.0
  %979 = vmatprep.subr.mxu0 0.0
  %980 = vmatpush1.msra.mxu0 0.0
  %981 = vmatprep.subr.mxu0 0.0
  %982 = vmatpush1.msra.mxu0 0.0
  %983 = vmatprep.subr.mxu0 0.0
  %984 = vmatpush1.msra.mxu0 0.0
  %985 = vmatprep.subr.mxu0 0.0
  %986 = vmatpush1.msra.mxu0 0.0
  %987 = vmatprep.subr.mxu0 0.0
  %988 = vmatpush1.msra.mxu0 0.0
  %989 = vmatprep.subr.mxu0 0.0
  %990 = vmatpush1.msra.mxu0 0.0
  %991 = vmatprep.subr.mxu0 0.0
  %992 = vmatpush1.msra.mxu0 0.0
  %993 = vmatprep.subr.mxu0 0.0
  %994 = vmatpush1.msra.mxu0 0.0
  %995 = vmatprep.subr.mxu0 0.0
  %996 = vmatpush1.msra.mxu0 %v958
  %997 = vmatprep.subr.mxu0 0.0
  %998 = vmatpush1.msra.mxu0 %v955
  %999 = vmatprep.subr.mxu0 0.0
  %1000 = vmatpush1.msra.mxu0 %v952
  %1001 = vmatprep.subr.mxu0 0.0
  %1002 = vmatpush2.msra.mxu0 0.0
  %1003 = vmatprep.subr.mxu0 0.0
  %1004 = vmatpush2.msra.mxu0 0.0
  %1005 = vmatprep.subr.mxu0 0.0
  %1006 = vmatpush2.msra.mxu0 0.0
  %1007 = vmatprep.subr.mxu0 0.0
  %1008 = vmatpush2.msra.mxu0 0.0
  %1009 = vmatprep.subr.mxu0 0.0
  %1010 = vmatpush2.msra.mxu0 0.0
  %1011 = vmatprep.subr.mxu0 0.0
  %1012 = vmatpush2.msra.mxu0 0.0
  %1013 = vmatprep.subr.mxu0 0.0
  %1014 = vmatpush2.msra.mxu0 0.0
  %1015 = vmatprep.subr.mxu0 0.0
  %1016 = vmatpush2.msra.mxu0 0.0
  %1017 = vmatprep.subr.mxu0 0.0
  %1018 = vmatpush2.msra.mxu0 0.0
  %1019 = vmatprep.subr.mxu0 0.0
  %1020 = vmatpush2.msra.mxu0 0.0
  %1021 = vmatprep.subr.mxu0 0.0
  %1022 = vmatpush2.msra.mxu0 0.0
  %1023 = vmatprep.subr.mxu0 0.0
  %1024 = vmatpush2.msra.mxu0 0.0
  %1025 = vmatprep.subr.mxu0 0.0
  %1026 = vmatpush2.msra.mxu0 0.0
  %1027 = vmatprep.subr.mxu0 0.0
  %1028 = vmatpush2.msra.mxu0 0.0
  %1029 = vmatprep.subr.mxu0 0.0
  %1030 = vmatpush2.msra.mxu0 0.0
  %1031 = vmatprep.subr.mxu0 0.0
  %1032 = vmatpush2.msra.mxu0 0.0
  %1033 = vmatprep.mubr.f32.mxu0 0.0
  %1034 = vmatmul.mubr.f32.gmra.mxu0 %v964
  %v1035 = vpop.f32.mrf.mxu0
  %v1036 = vadd.f32 0.0, %v1035
  %v1037 = vpop.f32.mrf.mxu0
  %1038 = vmatprep.mubr.f32.mxu0 0.0
  %1039 = vmatmul.mubr.f32.gmra.mxu0 %v967
  %v1040 = vpop.f32.mrf.mxu0
  %v1041 = vadd.f32 0.0, %v1040
  %v1042 = vpop.f32.mrf.mxu0
  %1043 = vdwg.mxu0
  %v1044 = vtanh.pop %v1036
  %v1045 = vxor.u32 %v1041, 2147483648
  %v1046 = vmul.f32 %v1045, 1.442695
  %v1047 = vpow.pop %v1046
  %v1048 = vadd.f32 %v1047, 1.0
  %v1049 = vrcp.pop %v1048
  %v1050 = vmul.f32 1.0, %v1049
  %v1051 = vmul.f32 %v1044, %v1050
  %v1052 = vmul.f32 %v1051, %v116
  %v1053 = vld [vmem:[#allocation3] sm:$0xff]
  %v1054 = vld [vmem:[#allocation3 + $0x8] sm:$0xff]
  %s1055 = scalar_lea.vmem %s5, 48
  %v1056 = vld [vmem:[%s1055] sm:$0xff]
  %v1057 = vld [vmem:[%s1055 + $0x8] sm:$0xff]
  %v1059 = vsel %vm238, %v1056, 0
  %v1062 = vsel %vm238, %v1057, 0
  %1064 = vmatprep.subr.mxu0 0.0
  %1065 = vmatpush1.msra.mxu0 0.0
  %1066 = vmatprep.subr.mxu0 0.0
  %1067 = vmatpush1.msra.mxu0 0.0
  %1068 = vmatprep.subr.mxu0 0.0
  %1069 = vmatpush1.msra.mxu0 0.0
  %1070 = vmatprep.subr.mxu0 0.0
  %1071 = vmatpush1.msra.mxu0 0.0
  %1072 = vmatprep.subr.mxu0 0.0
  %1073 = vmatpush1.msra.mxu0 0.0
  %1074 = vmatprep.subr.mxu0 0.0
  %1075 = vmatpush1.msra.mxu0 0.0
  %1076 = vmatprep.subr.mxu0 0.0
  %1077 = vmatpush1.msra.mxu0 0.0
  %1078 = vmatprep.subr.mxu0 0.0
  %1079 = vmatpush1.msra.mxu0 0.0
  %1080 = vmatprep.subr.mxu0 0.0
  %1081 = vmatpush1.msra.mxu0 0.0
  %1082 = vmatprep.subr.mxu0 0.0
  %1083 = vmatpush1.msra.mxu0 0.0
  %1084 = vmatprep.subr.mxu0 0.0
  %1085 = vmatpush1.msra.mxu0 0.0
  %1086 = vmatprep.subr.mxu0 0.0
  %1087 = vmatpush1.msra.mxu0 0.0
  %1088 = vmatprep.subr.mxu0 0.0
  %1089 = vmatpush1.msra.mxu0 0.0
  %1090 = vmatprep.subr.mxu0 0.0
  %1091 = vmatpush1.msra.mxu0 0.0
  %1092 = vmatprep.subr.mxu0 0.0
  %1093 = vmatpush1.msra.mxu0 0.0
  %1094 = vmatprep.subr.mxu0 0.0
  %1095 = vmatpush1.msra.mxu0 %v1052
  %1096 = vmatprep.subr.mxu0 0.0
  %1097 = vmatpush2.msra.mxu0 0.0
  %1098 = vmatprep.subr.mxu0 0.0
  %1099 = vmatpush2.msra.mxu0 0.0
  %1100 = vmatprep.subr.mxu0 0.0
  %1101 = vmatpush2.msra.mxu0 0.0
  %1102 = vmatprep.subr.mxu0 0.0
  %1103 = vmatpush2.msra.mxu0 0.0
  %1104 = vmatprep.subr.mxu0 0.0
  %1105 = vmatpush2.msra.mxu0 0.0
  %1106 = vmatprep.subr.mxu0 0.0
  %1107 = vmatpush2.msra.mxu0 0.0
  %1108 = vmatprep.subr.mxu0 0.0
  %1109 = vmatpush2.msra.mxu0 0.0
  %1110 = vmatprep.subr.mxu0 0.0
  %1111 = vmatpush2.msra.mxu0 0.0
  %1112 = vmatprep.subr.mxu0 0.0
  %1113 = vmatpush2.msra.mxu0 0.0
  %1114 = vmatprep.subr.mxu0 0.0
  %1115 = vmatpush2.msra.mxu0 0.0
  %1116 = vmatprep.subr.mxu0 0.0
  %1117 = vmatpush2.msra.mxu0 0.0
  %1118 = vmatprep.subr.mxu0 0.0
  %1119 = vmatpush2.msra.mxu0 0.0
  %1120 = vmatprep.subr.mxu0 0.0
  %1121 = vmatpush2.msra.mxu0 0.0
  %1122 = vmatprep.subr.mxu0 0.0
  %1123 = vmatpush2.msra.mxu0 0.0
  %1124 = vmatprep.subr.mxu0 0.0
  %1125 = vmatpush2.msra.mxu0 0.0
  %1126 = vmatprep.subr.mxu0 0.0
  %1127 = vmatpush2.msra.mxu0 0.0
  %1128 = vmatprep.mubr.f32.mxu0 0.0
  %1129 = vmatmul.mubr.f32.gmra.mxu0 %v1059
  %v1130 = vpop.f32.mrf.mxu0
  %v1131 = vadd.f32 0.0, %v1130
  %v1132 = vpop.f32.mrf.mxu0
  %1133 = vmatprep.mubr.f32.mxu0 0.0
  %1134 = vmatmul.mubr.f32.gmra.mxu0 %v1062
  %v1135 = vpop.f32.mrf.mxu0
  %v1136 = vadd.f32 0.0, %v1135
  %v1137 = vpop.f32.mrf.mxu0
  %1138 = vdwg.mxu0
  %v1139 = vadd.f32 %v1053, %v1131
  %v1140 = vadd.f32 %v1054, %v1136
  %1141 = vst.msk [vmem:[#allocation3] sm:$0xff] %vm125, %v1139
  %1142 = vst.msk [vmem:[#allocation3 + $0x8] sm:$0xff] %vm125, %v1140
  %s1143 = scalar_lea.vmem %s4, 24
  %v1144 = vld [vmem:[%s1143] sm:$0xff]
  %v1146 = vsel %vm238, %v1144, 0
  %1148 = vmatprep.subr.mxu0 0.0
  %1149 = vmatpush1.msra.mxu0 0.0
  %1150 = vmatprep.subr.mxu0 0.0
  %1151 = vmatpush1.msra.mxu0 0.0
  %1152 = vmatprep.subr.mxu0 0.0
  %1153 = vmatpush1.msra.mxu0 0.0
  %1154 = vmatprep.subr.mxu0 0.0
  %1155 = vmatpush1.msra.mxu0 0.0
  %1156 = vmatprep.subr.mxu0 0.0
  %1157 = vmatpush1.msra.mxu0 0.0
  %1158 = vmatprep.subr.mxu0 0.0
  %1159 = vmatpush1.msra.mxu0 0.0
  %1160 = vmatprep.subr.mxu0 0.0
  %1161 = vmatpush1.msra.mxu0 0.0
  %1162 = vmatprep.subr.mxu0 0.0
  %1163 = vmatpush1.msra.mxu0 0.0
  %1164 = vmatprep.subr.mxu0 0.0
  %1165 = vmatpush1.msra.mxu0 0.0
  %1166 = vmatprep.subr.mxu0 0.0
  %1167 = vmatpush1.msra.mxu0 0.0
  %1168 = vmatprep.subr.mxu0 0.0
  %1169 = vmatpush1.msra.mxu0 0.0
  %1170 = vmatprep.subr.mxu0 0.0
  %1171 = vmatpush1.msra.mxu0 0.0
  %1172 = vmatprep.subr.mxu0 0.0
  %1173 = vmatpush1.msra.mxu0 0.0
  %1174 = vmatprep.subr.mxu0 0.0
  %1175 = vmatpush1.msra.mxu0 0.0
  %1176 = vmatprep.subr.mxu0 0.0
  %1177 = vmatpush1.msra.mxu0 0.0
  %1178 = vmatprep.subr.mxu0 0.0
  %1179 = vmatpush1.msra.mxu0 %v1052
  %1180 = vmatprep.subr.mxu0 0.0
  %1181 = vmatpush2.msra.mxu0 0.0
  %1182 = vmatprep.subr.mxu0 0.0
  %1183 = vmatpush2.msra.mxu0 0.0
  %1184 = vmatprep.subr.mxu0 0.0
  %1185 = vmatpush2.msra.mxu0 0.0
  %1186 = vmatprep.subr.mxu0 0.0
  %1187 = vmatpush2.msra.mxu0 0.0
  %1188 = vmatprep.subr.mxu0 0.0
  %1189 = vmatpush2.msra.mxu0 0.0
  %1190 = vmatprep.subr.mxu0 0.0
  %1191 = vmatpush2.msra.mxu0 0.0
  %1192 = vmatprep.subr.mxu0 0.0
  %1193 = vmatpush2.msra.mxu0 0.0
  %1194 = vmatprep.subr.mxu0 0.0
  %1195 = vmatpush2.msra.mxu0 0.0
  %1196 = vmatprep.subr.mxu0 0.0
  %1197 = vmatpush2.msra.mxu0 0.0
  %1198 = vmatprep.subr.mxu0 0.0
  %1199 = vmatpush2.msra.mxu0 0.0
  %1200 = vmatprep.subr.mxu0 0.0
  %1201 = vmatpush2.msra.mxu0 0.0
  %1202 = vmatprep.subr.mxu0 0.0
  %1203 = vmatpush2.msra.mxu0 0.0
  %1204 = vmatprep.subr.mxu0 0.0
  %1205 = vmatpush2.msra.mxu0 0.0
  %1206 = vmatprep.subr.mxu0 0.0
  %1207 = vmatpush2.msra.mxu0 0.0
  %1208 = vmatprep.subr.mxu0 0.0
  %1209 = vmatpush2.msra.mxu0 0.0
  %1210 = vmatprep.subr.mxu0 0.0
  %1211 = vmatpush2.msra.mxu0 0.0
  %1212 = vmatprep.mubr.f32.mxu0 0.0
  %1213 = vmatmul.mubr.f32.gmra.mxu0 %v1146
  %v1214 = vpop.f32.mrf.mxu0
  %v1215 = vadd.f32 %v955, %v1214
  %v1216 = vpop.f32.mrf.mxu0
  %1217 = vdwg.mxu0
  %1219 = vrot.lane.b32.xlu0 %v1215, 2
  %v1220 = vpop.permute.xlu0 %1219
  %1222 = vst.msk [vmem:[#allocation2] sm:$0xff] %vm123, %v1220
  %v1223 = vld [vmem:[#allocation3] sm:$0xff]
  %v1224 = vld [vmem:[#allocation3 + $0x8] sm:$0xff]
  %v1225 = vmax.f32 %v1223, 0.0
  %v1226 = vmax.f32 %v1224, 0.0
  %v1227 = vld [vmem:[%s6] sm:$0xff]
  %v1228 = vld [vmem:[%s6 + $0x8] sm:$0xff]
  %v1229 = vld [vmem:[%s6 + $0x10] sm:$0xff]
  %v1230 = vld [vmem:[%s6 + $0x18] sm:$0xff]
  %v1231 = vld [vmem:[%s6 + $0x20] sm:$0xff]
  %v1232 = vld [vmem:[%s6 + $0x28] sm:$0xff]
  %v1233 = vld [vmem:[%s6 + $0x30] sm:$0xff]
  %v1234 = vld [vmem:[%s6 + $0x38] sm:$0xff]
  %v1235 = vld [vmem:[%s6 + $0x40] sm:$0xff]
  %v1236 = vld [vmem:[%s6 + $0x48] sm:$0xff]
  %v1237 = vld [vmem:[%s6 + $0x50] sm:$0xff]
  %v1238 = vld [vmem:[%s6 + $0x58] sm:$0xff]
  %v1239 = vld [vmem:[%s6 + $0x60] sm:$0xff]
  %v1240 = vld [vmem:[%s6 + $0x68] sm:$0xff]
  %v1241 = vld [vmem:[%s6 + $0x70] sm:$0xff]
  %v1242 = vld [vmem:[%s6 + $0x78] sm:$0xff]
  %v1243 = vld [vmem:[%s6 + $0x80] sm:$0xff]
  %v1244 = vld [vmem:[%s6 + $0x88] sm:$0xff]
  %v1245 = vld [vmem:[%s6 + $0x90] sm:$0xff]
  %v1246 = vld [vmem:[%s6 + $0x98] sm:$0xff]
  %v1247 = vld [vmem:[%s6 + $0xa0] sm:$0xff]
  %v1248 = vld [vmem:[%s6 + $0xa8] sm:$0xff]
  %v1249 = vld [vmem:[%s6 + $0xb0] sm:$0xff]
  %v1250 = vld [vmem:[%s6 + $0xb8] sm:$0xff]
  %v1251 = vld [vmem:[%s6 + $0xc0] sm:$0xff]
  %v1252 = vld [vmem:[%s6 + $0xc8] sm:$0xff]
  %v1253 = vld [vmem:[%s6 + $0xd0] sm:$0xff]
  %v1254 = vld [vmem:[%s6 + $0xd8] sm:$0xff]
  %v1255 = vld [vmem:[%s6 + $0xe0] sm:$0xff]
  %v1256 = vld [vmem:[%s6 + $0xe8] sm:$0xff]
  %v1257 = vld [vmem:[%s6 + $0xf0] sm:$0xff]
  %v1258 = vld [vmem:[%s6 + $0xf8] sm:$0xff]
  %1261 = vrot.lane.b32.xlu0 %v1225, 126
  %v1262 = vpop.permute.xlu0 %1261
  %1263 = vrot.lane.b32.xlu0 %v1226, 126
  %v1264 = vpop.permute.xlu0 %1263
  %v1267 = vmul.f32 %v1227, %v1262
  %v1268 = vmul.f32 %v1228, %v1264
  %v1269 = vmul.f32 %v1229, %v1262
  %v1270 = vmul.f32 %v1230, %v1264
  %v1271 = vmul.f32 %v1231, %v1262
  %v1272 = vmul.f32 %v1232, %v1264
  %v1273 = vmul.f32 %v1233, %v1262
  %v1274 = vmul.f32 %v1234, %v1264
  %v1275 = vmul.f32 %v1235, %v1262
  %v1276 = vmul.f32 %v1236, %v1264
  %v1277 = vmul.f32 %v1237, %v1262
  %v1278 = vmul.f32 %v1238, %v1264
  %v1279 = vmul.f32 %v1239, %v1262
  %v1280 = vmul.f32 %v1240, %v1264
  %v1281 = vmul.f32 %v1241, %v1262
  %v1282 = vmul.f32 %v1242, %v1264
  %v1283 = vmul.f32 %v1243, %v1262
  %v1284 = vmul.f32 %v1244, %v1264
  %v1285 = vmul.f32 %v1245, %v1262
  %v1286 = vmul.f32 %v1246, %v1264
  %v1287 = vmul.f32 %v1247, %v1262
  %v1288 = vmul.f32 %v1248, %v1264
  %v1289 = vmul.f32 %v1249, %v1262
  %v1290 = vmul.f32 %v1250, %v1264
  %v1291 = vmul.f32 %v1251, %v1262
  %v1292 = vmul.f32 %v1252, %v1264
  %v1293 = vmul.f32 %v1253, %v1262
  %v1294 = vmul.f32 %v1254, %v1264
  %v1295 = vmul.f32 %v1255, %v1262
  %v1296 = vmul.f32 %v1256, %v1264
  %v1297 = vmul.f32 %v1257, %v1262
  %v1298 = vmul.f32 %v1258, %v1264
  %vm1299 = vcmask 130048
  %v1300 = vsel %vm1299, %v1267, 0.0
  %1301 = vadd.xlane.f32.xlu0 %v1300
  %v1302 = vpop.xlane.xlu0 %1301
  %v1303 = vsel %vm1299, %v1268, 0.0
  %1304 = vadd.xlane.f32.xlu0 %v1303
  %v1305 = vpop.xlane.xlu0 %1304
  %v1306 = vsel %vm1299, %v1269, 0.0
  %1307 = vadd.xlane.f32.xlu0 %v1306
  %v1308 = vpop.xlane.xlu0 %1307
  %v1309 = vsel %vm1299, %v1270, 0.0
  %1310 = vadd.xlane.f32.xlu0 %v1309
  %v1311 = vpop.xlane.xlu0 %1310
  %v1312 = vsel %vm1299, %v1271, 0.0
  %1313 = vadd.xlane.f32.xlu0 %v1312
  %v1314 = vpop.xlane.xlu0 %1313
  %v1315 = vsel %vm1299, %v1272, 0.0
  %1316 = vadd.xlane.f32.xlu0 %v1315
  %v1317 = vpop.xlane.xlu0 %1316
  %v1318 = vsel %vm1299, %v1273, 0.0
  %1319 = vadd.xlane.f32.xlu0 %v1318
  %v1320 = vpop.xlane.xlu0 %1319
  %v1321 = vsel %vm1299, %v1274, 0.0
  %1322 = vadd.xlane.f32.xlu0 %v1321
  %v1323 = vpop.xlane.xlu0 %1322
  %v1324 = vsel %vm1299, %v1275, 0.0
  %1325 = vadd.xlane.f32.xlu0 %v1324
  %v1326 = vpop.xlane.xlu0 %1325
  %v1327 = vsel %vm1299, %v1276, 0.0
  %1328 = vadd.xlane.f32.xlu0 %v1327
  %v1329 = vpop.xlane.xlu0 %1328
  %v1330 = vsel %vm1299, %v1277, 0.0
  %1331 = vadd.xlane.f32.xlu0 %v1330
  %v1332 = vpop.xlane.xlu0 %1331
  %v1333 = vsel %vm1299, %v1278, 0.0
  %1334 = vadd.xlane.f32.xlu0 %v1333
  %v1335 = vpop.xlane.xlu0 %1334
  %v1336 = vsel %vm1299, %v1279, 0.0
  %1337 = vadd.xlane.f32.xlu0 %v1336
  %v1338 = vpop.xlane.xlu0 %1337
  %v1339 = vsel %vm1299, %v1280, 0.0
  %1340 = vadd.xlane.f32.xlu0 %v1339
  %v1341 = vpop.xlane.xlu0 %1340
  %v1342 = vsel %vm1299, %v1281, 0.0
  %1343 = vadd.xlane.f32.xlu0 %v1342
  %v1344 = vpop.xlane.xlu0 %1343
  %v1345 = vsel %vm1299, %v1282, 0.0
  %1346 = vadd.xlane.f32.xlu0 %v1345
  %v1347 = vpop.xlane.xlu0 %1346
  %v1348 = vsel %vm1299, %v1283, 0.0
  %1349 = vadd.xlane.f32.xlu0 %v1348
  %v1350 = vpop.xlane.xlu0 %1349
  %v1351 = vsel %vm1299, %v1284, 0.0
  %1352 = vadd.xlane.f32.xlu0 %v1351
  %v1353 = vpop.xlane.xlu0 %1352
  %v1354 = vsel %vm1299, %v1285, 0.0
  %1355 = vadd.xlane.f32.xlu0 %v1354
  %v1356 = vpop.xlane.xlu0 %1355
  %v1357 = vsel %vm1299, %v1286, 0.0
  %1358 = vadd.xlane.f32.xlu0 %v1357
  %v1359 = vpop.xlane.xlu0 %1358
  %v1360 = vsel %vm1299, %v1287, 0.0
  %1361 = vadd.xlane.f32.xlu0 %v1360
  %v1362 = vpop.xlane.xlu0 %1361
  %v1363 = vsel %vm1299, %v1288, 0.0
  %1364 = vadd.xlane.f32.xlu0 %v1363
  %v1365 = vpop.xlane.xlu0 %1364
  %v1366 = vsel %vm1299, %v1289, 0.0
  %1367 = vadd.xlane.f32.xlu0 %v1366
  %v1368 = vpop.xlane.xlu0 %1367
  %v1369 = vsel %vm1299, %v1290, 0.0
  %1370 = vadd.xlane.f32.xlu0 %v1369
  %v1371 = vpop.xlane.xlu0 %1370
  %v1372 = vsel %vm1299, %v1291, 0.0
  %1373 = vadd.xlane.f32.xlu0 %v1372
  %v1374 = vpop.xlane.xlu0 %1373
  %v1375 = vsel %vm1299, %v1292, 0.0
  %1376 = vadd.xlane.f32.xlu0 %v1375
  %v1377 = vpop.xlane.xlu0 %1376
  %v1378 = vsel %vm1299, %v1293, 0.0
  %1379 = vadd.xlane.f32.xlu0 %v1378
  %v1380 = vpop.xlane.xlu0 %1379
  %v1381 = vsel %vm1299, %v1294, 0.0
  %1382 = vadd.xlane.f32.xlu0 %v1381
  %v1383 = vpop.xlane.xlu0 %1382
  %v1384 = vsel %vm1299, %v1295, 0.0
  %1385 = vadd.xlane.f32.xlu0 %v1384
  %v1386 = vpop.xlane.xlu0 %1385
  %v1387 = vsel %vm1299, %v1296, 0.0
  %1388 = vadd.xlane.f32.xlu0 %v1387
  %v1389 = vpop.xlane.xlu0 %1388
  %v1390 = vsel %vm1299, %v1297, 0.0
  %1391 = vadd.xlane.f32.xlu0 %v1390
  %v1392 = vpop.xlane.xlu0 %1391
  %v1393 = vsel %vm1299, %v1298, 0.0
  %1394 = vadd.xlane.f32.xlu0 %v1393
  %v1395 = vpop.xlane.xlu0 %1394
  %v1428 = vlaneseq
  %v1429 = vand.u32 %v1428, 127
  %v1430 = vlaneseq
  %v1431 = vshrl.u32 %v1430, 7
  %v1432 = vsub.s32 %v1429, %v1431
  %v1433 = vrot.slane %v1302, %v1432
  %v1434 = vadd.s32 %v1429, 4294967288
  %v1435 = vlaneseq
  %v1436 = vshrl.u32 %v1435, 7
  %v1437 = vsub.s32 %v1434, %v1436
  %v1438 = vrot.slane %v1305, %v1437
  %vm1439 = vcmask 130112
  %v1440 = vsel %vm1439, %v1438, %v1433
  %v1441 = vlaneseq
  %v1442 = vshrl.u32 %v1441, 7
  %v1443 = vsub.s32 %v1429, %v1442
  %v1444 = vrot.slane %v1308, %v1443
  %v1445 = vlaneseq
  %v1446 = vshrl.u32 %v1445, 7
  %v1447 = vsub.s32 %v1434, %v1446
  %v1448 = vrot.slane %v1311, %v1447
  %v1449 = vsel %vm1439, %v1448, %v1444
  %v1450 = vlaneseq
  %v1451 = vshrl.u32 %v1450, 7
  %v1452 = vsub.s32 %v1429, %v1451
  %v1453 = vrot.slane %v1314, %v1452
  %v1454 = vlaneseq
  %v1455 = vshrl.u32 %v1454, 7
  %v1456 = vsub.s32 %v1434, %v1455
  %v1457 = vrot.slane %v1317, %v1456
  %v1458 = vsel %vm1439, %v1457, %v1453
  %v1459 = vlaneseq
  %v1460 = vshrl.u32 %v1459, 7
  %v1461 = vsub.s32 %v1429, %v1460
  %v1462 = vrot.slane %v1320, %v1461
  %v1463 = vlaneseq
  %v1464 = vshrl.u32 %v1463, 7
  %v1465 = vsub.s32 %v1434, %v1464
  %v1466 = vrot.slane %v1323, %v1465
  %v1467 = vsel %vm1439, %v1466, %v1462
  %v1468 = vlaneseq
  %v1469 = vshrl.u32 %v1468, 7
  %v1470 = vsub.s32 %v1429, %v1469
  %v1471 = vrot.slane %v1326, %v1470
  %v1472 = vlaneseq
  %v1473 = vshrl.u32 %v1472, 7
  %v1474 = vsub.s32 %v1434, %v1473
  %v1475 = vrot.slane %v1329, %v1474
  %v1476 = vsel %vm1439, %v1475, %v1471
  %v1477 = vlaneseq
  %v1478 = vshrl.u32 %v1477, 7
  %v1479 = vsub.s32 %v1429, %v1478
  %v1480 = vrot.slane %v1332, %v1479
  %v1481 = vlaneseq
  %v1482 = vshrl.u32 %v1481, 7
  %v1483 = vsub.s32 %v1434, %v1482
  %v1484 = vrot.slane %v1335, %v1483
  %v1485 = vsel %vm1439, %v1484, %v1480
  %v1486 = vlaneseq
  %v1487 = vshrl.u32 %v1486, 7
  %v1488 = vsub.s32 %v1429, %v1487
  %v1489 = vrot.slane %v1338, %v1488
  %v1490 = vlaneseq
  %v1491 = vshrl.u32 %v1490, 7
  %v1492 = vsub.s32 %v1434, %v1491
  %v1493 = vrot.slane %v1341, %v1492
  %v1494 = vsel %vm1439, %v1493, %v1489
  %v1495 = vlaneseq
  %v1496 = vshrl.u32 %v1495, 7
  %v1497 = vsub.s32 %v1429, %v1496
  %v1498 = vrot.slane %v1344, %v1497
  %v1499 = vlaneseq
  %v1500 = vshrl.u32 %v1499, 7
  %v1501 = vsub.s32 %v1434, %v1500
  %v1502 = vrot.slane %v1347, %v1501
  %v1503 = vsel %vm1439, %v1502, %v1498
  %v1504 = vlaneseq
  %v1505 = vshrl.u32 %v1504, 7
  %v1506 = vsub.s32 %v1429, %v1505
  %v1507 = vrot.slane %v1350, %v1506
  %v1508 = vlaneseq
  %v1509 = vshrl.u32 %v1508, 7
  %v1510 = vsub.s32 %v1434, %v1509
  %v1511 = vrot.slane %v1353, %v1510
  %v1512 = vsel %vm1439, %v1511, %v1507
  %v1513 = vlaneseq
  %v1514 = vshrl.u32 %v1513, 7
  %v1515 = vsub.s32 %v1429, %v1514
  %v1516 = vrot.slane %v1356, %v1515
  %v1517 = vlaneseq
  %v1518 = vshrl.u32 %v1517, 7
  %v1519 = vsub.s32 %v1434, %v1518
  %v1520 = vrot.slane %v1359, %v1519
  %v1521 = vsel %vm1439, %v1520, %v1516
  %v1522 = vlaneseq
  %v1523 = vshrl.u32 %v1522, 7
  %v1524 = vsub.s32 %v1429, %v1523
  %v1525 = vrot.slane %v1362, %v1524
  %v1526 = vlaneseq
  %v1527 = vshrl.u32 %v1526, 7
  %v1528 = vsub.s32 %v1434, %v1527
  %v1529 = vrot.slane %v1365, %v1528
  %v1530 = vsel %vm1439, %v1529, %v1525
  %v1531 = vlaneseq
  %v1532 = vshrl.u32 %v1531, 7
  %v1533 = vsub.s32 %v1429, %v1532
  %v1534 = vrot.slane %v1368, %v1533
  %v1535 = vlaneseq
  %v1536 = vshrl.u32 %v1535, 7
  %v1537 = vsub.s32 %v1434, %v1536
  %v1538 = vrot.slane %v1371, %v1537
  %v1539 = vsel %vm1439, %v1538, %v1534
  %v1540 = vlaneseq
  %v1541 = vshrl.u32 %v1540, 7
  %v1542 = vsub.s32 %v1429, %v1541
  %v1543 = vrot.slane %v1374, %v1542
  %v1544 = vlaneseq
  %v1545 = vshrl.u32 %v1544, 7
  %v1546 = vsub.s32 %v1434, %v1545
  %v1547 = vrot.slane %v1377, %v1546
  %v1548 = vsel %vm1439, %v1547, %v1543
  %v1549 = vlaneseq
  %v1550 = vshrl.u32 %v1549, 7
  %v1551 = vsub.s32 %v1429, %v1550
  %v1552 = vrot.slane %v1380, %v1551
  %v1553 = vlaneseq
  %v1554 = vshrl.u32 %v1553, 7
  %v1555 = vsub.s32 %v1434, %v1554
  %v1556 = vrot.slane %v1383, %v1555
  %v1557 = vsel %vm1439, %v1556, %v1552
  %v1558 = vlaneseq
  %v1559 = vshrl.u32 %v1558, 7
  %v1560 = vsub.s32 %v1429, %v1559
  %v1561 = vrot.slane %v1386, %v1560
  %v1562 = vlaneseq
  %v1563 = vshrl.u32 %v1562, 7
  %v1564 = vsub.s32 %v1434, %v1563
  %v1565 = vrot.slane %v1389, %v1564
  %v1566 = vsel %vm1439, %v1565, %v1561
  %v1567 = vlaneseq
  %v1568 = vshrl.u32 %v1567, 7
  %v1569 = vsub.s32 %v1429, %v1568
  %v1570 = vrot.slane %v1392, %v1569
  %v1571 = vlaneseq
  %v1572 = vshrl.u32 %v1571, 7
  %v1573 = vsub.s32 %v1434, %v1572
  %v1574 = vrot.slane %v1395, %v1573
  %v1575 = vsel %vm1439, %v1574, %v1570
  %vm1576 = vcmask 1041409
  %v1577 = vsel %vm1576, %v1449, %v1440
  %vm1578 = vcmask 1042434
  %v1579 = vsel %vm1578, %v1458, %v1577
  %vm1580 = vcmask 1043459
  %v1581 = vsel %vm1580, %v1467, %v1579
  %vm1582 = vcmask 1044484
  %v1583 = vsel %vm1582, %v1476, %v1581
  %vm1584 = vcmask 1045509
  %v1585 = vsel %vm1584, %v1485, %v1583
  %vm1586 = vcmask 1046534
  %v1587 = vsel %vm1586, %v1494, %v1585
  %vm1588 = vcmask 1047559
  %v1589 = vsel %vm1588, %v1503, %v1587
  %v1590 = vsel %vm1576, %v1521, %v1512
  %v1591 = vsel %vm1578, %v1530, %v1590
  %v1592 = vsel %vm1580, %v1539, %v1591
  %v1593 = vsel %vm1582, %v1548, %v1592
  %v1594 = vsel %vm1584, %v1557, %v1593
  %v1595 = vsel %vm1586, %v1566, %v1594
  %v1596 = vsel %vm1588, %v1575, %v1595
  %v1599 = vsel %vm1299, %v1589, 0.0
  %1600 = vadd.xlane.f32.xlu0 %v1599
  %v1601 = vpop.xlane.xlu0 %1600
  %v1602 = vsel %vm1299, %v1596, 0.0
  %1603 = vadd.xlane.f32.xlu0 %v1602
  %v1604 = vpop.xlane.xlu0 %1603
  %v1605 = vld [vmem:[%s7] sm:$0xff]
  %v1606 = vld [vmem:[%s7 + $0x8] sm:$0xff]
  %v1607 = vadd.f32 %v1601, %v1605
  %v1608 = vadd.f32 %v1604, %v1606
  %vm1609 = vcmask 7168
  %1610 = vst.msk [vmem:[%s8] sm:$0xff] %vm1609, %v1607
  %1611 = vst.msk [vmem:[%s8 + $0x8] sm:$0xff] %vm1609, %v1608
  %1612 = vrot.lane.b32.xlu0 %v1225, 106
  %v1613 = vpop.permute.xlu0 %1612
  %1614 = vrot.lane.b32.xlu0 %v1226, 106
  %v1615 = vpop.permute.xlu0 %1614
  %v1618 = vmul.f32 %v1227, %v1613
  %v1619 = vmul.f32 %v1228, %v1615
  %v1620 = vmul.f32 %v1229, %v1613
  %v1621 = vmul.f32 %v1230, %v1615
  %v1622 = vmul.f32 %v1231, %v1613
  %v1623 = vmul.f32 %v1232, %v1615
  %v1624 = vmul.f32 %v1233, %v1613
  %v1625 = vmul.f32 %v1234, %v1615
  %v1626 = vmul.f32 %v1235, %v1613
  %v1627 = vmul.f32 %v1236, %v1615
  %v1628 = vmul.f32 %v1237, %v1613
  %v1629 = vmul.f32 %v1238, %v1615
  %v1630 = vmul.f32 %v1239, %v1613
  %v1631 = vmul.f32 %v1240, %v1615
  %v1632 = vmul.f32 %v1241, %v1613
  %v1633 = vmul.f32 %v1242, %v1615
  %v1634 = vmul.f32 %v1243, %v1613
  %v1635 = vmul.f32 %v1244, %v1615
  %v1636 = vmul.f32 %v1245, %v1613
  %v1637 = vmul.f32 %v1246, %v1615
  %v1638 = vmul.f32 %v1247, %v1613
  %v1639 = vmul.f32 %v1248, %v1615
  %v1640 = vmul.f32 %v1249, %v1613
  %v1641 = vmul.f32 %v1250, %v1615
  %v1642 = vmul.f32 %v1251, %v1613
  %v1643 = vmul.f32 %v1252, %v1615
  %v1644 = vmul.f32 %v1253, %v1613
  %v1645 = vmul.f32 %v1254, %v1615
  %v1646 = vmul.f32 %v1255, %v1613
  %v1647 = vmul.f32 %v1256, %v1615
  %v1648 = vmul.f32 %v1257, %v1613
  %v1649 = vmul.f32 %v1258, %v1615
  %v1650 = vsel %vm1299, %v1618, 0.0
  %1651 = vadd.xlane.f32.xlu0 %v1650
  %v1652 = vpop.xlane.xlu0 %1651
  %v1653 = vsel %vm1299, %v1619, 0.0
  %1654 = vadd.xlane.f32.xlu0 %v1653
  %v1655 = vpop.xlane.xlu0 %1654
  %v1656 = vsel %vm1299, %v1620, 0.0
  %1657 = vadd.xlane.f32.xlu0 %v1656
  %v1658 = vpop.xlane.xlu0 %1657
  %v1659 = vsel %vm1299, %v1621, 0.0
  %1660 = vadd.xlane.f32.xlu0 %v1659
  %v1661 = vpop.xlane.xlu0 %1660
  %v1662 = vsel %vm1299, %v1622, 0.0
  %1663 = vadd.xlane.f32.xlu0 %v1662
  %v1664 = vpop.xlane.xlu0 %1663
  %v1665 = vsel %vm1299, %v1623, 0.0
  %1666 = vadd.xlane.f32.xlu0 %v1665
  %v1667 = vpop.xlane.xlu0 %1666
  %v1668 = vsel %vm1299, %v1624, 0.0
  %1669 = vadd.xlane.f32.xlu0 %v1668
  %v1670 = vpop.xlane.xlu0 %1669
  %v1671 = vsel %vm1299, %v1625, 0.0
  %1672 = vadd.xlane.f32.xlu0 %v1671
  %v1673 = vpop.xlane.xlu0 %1672
  %v1674 = vsel %vm1299, %v1626, 0.0
  %1675 = vadd.xlane.f32.xlu0 %v1674
  %v1676 = vpop.xlane.xlu0 %1675
  %v1677 = vsel %vm1299, %v1627, 0.0
  %1678 = vadd.xlane.f32.xlu0 %v1677
  %v1679 = vpop.xlane.xlu0 %1678
  %v1680 = vsel %vm1299, %v1628, 0.0
  %1681 = vadd.xlane.f32.xlu0 %v1680
  %v1682 = vpop.xlane.xlu0 %1681
  %v1683 = vsel %vm1299, %v1629, 0.0
  %1684 = vadd.xlane.f32.xlu0 %v1683
  %v1685 = vpop.xlane.xlu0 %1684
  %v1686 = vsel %vm1299, %v1630, 0.0
  %1687 = vadd.xlane.f32.xlu0 %v1686
  %v1688 = vpop.xlane.xlu0 %1687
  %v1689 = vsel %vm1299, %v1631, 0.0
  %1690 = vadd.xlane.f32.xlu0 %v1689
  %v1691 = vpop.xlane.xlu0 %1690
  %v1692 = vsel %vm1299, %v1632, 0.0
  %1693 = vadd.xlane.f32.xlu0 %v1692
  %v1694 = vpop.xlane.xlu0 %1693
  %v1695 = vsel %vm1299, %v1633, 0.0
  %1696 = vadd.xlane.f32.xlu0 %v1695
  %v1697 = vpop.xlane.xlu0 %1696
  %v1698 = vsel %vm1299, %v1634, 0.0
  %1699 = vadd.xlane.f32.xlu0 %v1698
  %v1700 = vpop.xlane.xlu0 %1699
  %v1701 = vsel %vm1299, %v1635, 0.0
  %1702 = vadd.xlane.f32.xlu0 %v1701
  %v1703 = vpop.xlane.xlu0 %1702
  %v1704 = vsel %vm1299, %v1636, 0.0
  %1705 = vadd.xlane.f32.xlu0 %v1704
  %v1706 = vpop.xlane.xlu0 %1705
  %v1707 = vsel %vm1299, %v1637, 0.0
  %1708 = vadd.xlane.f32.xlu0 %v1707
  %v1709 = vpop.xlane.xlu0 %1708
  %v1710 = vsel %vm1299, %v1638, 0.0
  %1711 = vadd.xlane.f32.xlu0 %v1710
  %v1712 = vpop.xlane.xlu0 %1711
  %v1713 = vsel %vm1299, %v1639, 0.0
  %1714 = vadd.xlane.f32.xlu0 %v1713
  %v1715 = vpop.xlane.xlu0 %1714
  %v1716 = vsel %vm1299, %v1640, 0.0
  %1717 = vadd.xlane.f32.xlu0 %v1716
  %v1718 = vpop.xlane.xlu0 %1717
  %v1719 = vsel %vm1299, %v1641, 0.0
  %1720 = vadd.xlane.f32.xlu0 %v1719
  %v1721 = vpop.xlane.xlu0 %1720
  %v1722 = vsel %vm1299, %v1642, 0.0
  %1723 = vadd.xlane.f32.xlu0 %v1722
  %v1724 = vpop.xlane.xlu0 %1723
  %v1725 = vsel %vm1299, %v1643, 0.0
  %1726 = vadd.xlane.f32.xlu0 %v1725
  %v1727 = vpop.xlane.xlu0 %1726
  %v1728 = vsel %vm1299, %v1644, 0.0
  %1729 = vadd.xlane.f32.xlu0 %v1728
  %v1730 = vpop.xlane.xlu0 %1729
  %v1731 = vsel %vm1299, %v1645, 0.0
  %1732 = vadd.xlane.f32.xlu0 %v1731
  %v1733 = vpop.xlane.xlu0 %1732
  %v1734 = vsel %vm1299, %v1646, 0.0
  %1735 = vadd.xlane.f32.xlu0 %v1734
  %v1736 = vpop.xlane.xlu0 %1735
  %v1737 = vsel %vm1299, %v1647, 0.0
  %1738 = vadd.xlane.f32.xlu0 %v1737
  %v1739 = vpop.xlane.xlu0 %1738
  %v1740 = vsel %vm1299, %v1648, 0.0
  %1741 = vadd.xlane.f32.xlu0 %v1740
  %v1742 = vpop.xlane.xlu0 %1741
  %v1743 = vsel %vm1299, %v1649, 0.0
  %1744 = vadd.xlane.f32.xlu0 %v1743
  %v1745 = vpop.xlane.xlu0 %1744
  %v1778 = vlaneseq
  %v1779 = vshrl.u32 %v1778, 7
  %v1780 = vsub.s32 %v1429, %v1779
  %v1781 = vrot.slane %v1652, %v1780
  %v1782 = vlaneseq
  %v1783 = vshrl.u32 %v1782, 7
  %v1784 = vsub.s32 %v1434, %v1783
  %v1785 = vrot.slane %v1655, %v1784
  %v1786 = vsel %vm1439, %v1785, %v1781
  %v1787 = vlaneseq
  %v1788 = vshrl.u32 %v1787, 7
  %v1789 = vsub.s32 %v1429, %v1788
  %v1790 = vrot.slane %v1658, %v1789
  %v1791 = vlaneseq
  %v1792 = vshrl.u32 %v1791, 7
  %v1793 = vsub.s32 %v1434, %v1792
  %v1794 = vrot.slane %v1661, %v1793
  %v1795 = vsel %vm1439, %v1794, %v1790
  %v1796 = vlaneseq
  %v1797 = vshrl.u32 %v1796, 7
  %v1798 = vsub.s32 %v1429, %v1797
  %v1799 = vrot.slane %v1664, %v1798
  %v1800 = vlaneseq
  %v1801 = vshrl.u32 %v1800, 7
  %v1802 = vsub.s32 %v1434, %v1801
  %v1803 = vrot.slane %v1667, %v1802
  %v1804 = vsel %vm1439, %v1803, %v1799
  %v1805 = vlaneseq
  %v1806 = vshrl.u32 %v1805, 7
  %v1807 = vsub.s32 %v1429, %v1806
  %v1808 = vrot.slane %v1670, %v1807
  %v1809 = vlaneseq
  %v1810 = vshrl.u32 %v1809, 7
  %v1811 = vsub.s32 %v1434, %v1810
  %v1812 = vrot.slane %v1673, %v1811
  %v1813 = vsel %vm1439, %v1812, %v1808
  %v1814 = vlaneseq
  %v1815 = vshrl.u32 %v1814, 7
  %v1816 = vsub.s32 %v1429, %v1815
  %v1817 = vrot.slane %v1676, %v1816
  %v1818 = vlaneseq
  %v1819 = vshrl.u32 %v1818, 7
  %v1820 = vsub.s32 %v1434, %v1819
  %v1821 = vrot.slane %v1679, %v1820
  %v1822 = vsel %vm1439, %v1821, %v1817
  %v1823 = vlaneseq
  %v1824 = vshrl.u32 %v1823, 7
  %v1825 = vsub.s32 %v1429, %v1824
  %v1826 = vrot.slane %v1682, %v1825
  %v1827 = vlaneseq
  %v1828 = vshrl.u32 %v1827, 7
  %v1829 = vsub.s32 %v1434, %v1828
  %v1830 = vrot.slane %v1685, %v1829
  %v1831 = vsel %vm1439, %v1830, %v1826
  %v1832 = vlaneseq
  %v1833 = vshrl.u32 %v1832, 7
  %v1834 = vsub.s32 %v1429, %v1833
  %v1835 = vrot.slane %v1688, %v1834
  %v1836 = vlaneseq
  %v1837 = vshrl.u32 %v1836, 7
  %v1838 = vsub.s32 %v1434, %v1837
  %v1839 = vrot.slane %v1691, %v1838
  %v1840 = vsel %vm1439, %v1839, %v1835
  %v1841 = vlaneseq
  %v1842 = vshrl.u32 %v1841, 7
  %v1843 = vsub.s32 %v1429, %v1842
  %v1844 = vrot.slane %v1694, %v1843
  %v1845 = vlaneseq
  %v1846 = vshrl.u32 %v1845, 7
  %v1847 = vsub.s32 %v1434, %v1846
  %v1848 = vrot.slane %v1697, %v1847
  %v1849 = vsel %vm1439, %v1848, %v1844
  %v1850 = vlaneseq
  %v1851 = vshrl.u32 %v1850, 7
  %v1852 = vsub.s32 %v1429, %v1851
  %v1853 = vrot.slane %v1700, %v1852
  %v1854 = vlaneseq
  %v1855 = vshrl.u32 %v1854, 7
  %v1856 = vsub.s32 %v1434, %v1855
  %v1857 = vrot.slane %v1703, %v1856
  %v1858 = vsel %vm1439, %v1857, %v1853
  %v1859 = vlaneseq
  %v1860 = vshrl.u32 %v1859, 7
  %v1861 = vsub.s32 %v1429, %v1860
  %v1862 = vrot.slane %v1706, %v1861
  %v1863 = vlaneseq
  %v1864 = vshrl.u32 %v1863, 7
  %v1865 = vsub.s32 %v1434, %v1864
  %v1866 = vrot.slane %v1709, %v1865
  %v1867 = vsel %vm1439, %v1866, %v1862
  %v1868 = vlaneseq
  %v1869 = vshrl.u32 %v1868, 7
  %v1870 = vsub.s32 %v1429, %v1869
  %v1871 = vrot.slane %v1712, %v1870
  %v1872 = vlaneseq
  %v1873 = vshrl.u32 %v1872, 7
  %v1874 = vsub.s32 %v1434, %v1873
  %v1875 = vrot.slane %v1715, %v1874
  %v1876 = vsel %vm1439, %v1875, %v1871
  %v1877 = vlaneseq
  %v1878 = vshrl.u32 %v1877, 7
  %v1879 = vsub.s32 %v1429, %v1878
  %v1880 = vrot.slane %v1718, %v1879
  %v1881 = vlaneseq
  %v1882 = vshrl.u32 %v1881, 7
  %v1883 = vsub.s32 %v1434, %v1882
  %v1884 = vrot.slane %v1721, %v1883
  %v1885 = vsel %vm1439, %v1884, %v1880
  %v1886 = vlaneseq
  %v1887 = vshrl.u32 %v1886, 7
  %v1888 = vsub.s32 %v1429, %v1887
  %v1889 = vrot.slane %v1724, %v1888
  %v1890 = vlaneseq
  %v1891 = vshrl.u32 %v1890, 7
  %v1892 = vsub.s32 %v1434, %v1891
  %v1893 = vrot.slane %v1727, %v1892
  %v1894 = vsel %vm1439, %v1893, %v1889
  %v1895 = vlaneseq
  %v1896 = vshrl.u32 %v1895, 7
  %v1897 = vsub.s32 %v1429, %v1896
  %v1898 = vrot.slane %v1730, %v1897
  %v1899 = vlaneseq
  %v1900 = vshrl.u32 %v1899, 7
  %v1901 = vsub.s32 %v1434, %v1900
  %v1902 = vrot.slane %v1733, %v1901
  %v1903 = vsel %vm1439, %v1902, %v1898
  %v1904 = vlaneseq
  %v1905 = vshrl.u32 %v1904, 7
  %v1906 = vsub.s32 %v1429, %v1905
  %v1907 = vrot.slane %v1736, %v1906
  %v1908 = vlaneseq
  %v1909 = vshrl.u32 %v1908, 7
  %v1910 = vsub.s32 %v1434, %v1909
  %v1911 = vrot.slane %v1739, %v1910
  %v1912 = vsel %vm1439, %v1911, %v1907
  %v1913 = vlaneseq
  %v1914 = vshrl.u32 %v1913, 7
  %v1915 = vsub.s32 %v1429, %v1914
  %v1916 = vrot.slane %v1742, %v1915
  %v1917 = vlaneseq
  %v1918 = vshrl.u32 %v1917, 7
  %v1919 = vsub.s32 %v1434, %v1918
  %v1920 = vrot.slane %v1745, %v1919
  %v1921 = vsel %vm1439, %v1920, %v1916
  %v1922 = vsel %vm1576, %v1795, %v1786
  %v1923 = vsel %vm1578, %v1804, %v1922
  %v1924 = vsel %vm1580, %v1813, %v1923
  %v1925 = vsel %vm1582, %v1822, %v1924
  %v1926 = vsel %vm1584, %v1831, %v1925
  %v1927 = vsel %vm1586, %v1840, %v1926
  %v1928 = vsel %vm1588, %v1849, %v1927
  %v1929 = vsel %vm1576, %v1867, %v1858
  %v1930 = vsel %vm1578, %v1876, %v1929
  %v1931 = vsel %vm1580, %v1885, %v1930
  %v1932 = vsel %vm1582, %v1894, %v1931
  %v1933 = vsel %vm1584, %v1903, %v1932
  %v1934 = vsel %vm1586, %v1912, %v1933
  %v1935 = vsel %vm1588, %v1921, %v1934
  %v1938 = vsel %vm1299, %v1928, 0.0
  %1939 = vadd.xlane.f32.xlu0 %v1938
  %v1940 = vpop.xlane.xlu0 %1939
  %v1941 = vsel %vm1299, %v1935, 0.0
  %1942 = vadd.xlane.f32.xlu0 %v1941
  %v1943 = vpop.xlane.xlu0 %1942
  %v1944 = vld [vmem:[%s7] sm:$0xff]
  %v1945 = vld [vmem:[%s7 + $0x8] sm:$0xff]
  %v1946 = vadd.f32 %v1940, %v1944
  %v1947 = vadd.f32 %v1943, %v1945
  %1950 = vrot.lane.b32.xlu0 %v1946, 1
  %v1951 = vpop.permute.xlu0 %1950
  %1952 = vrot.lane.b32.xlu0 %v1947, 1
  %v1953 = vpop.permute.xlu0 %1952
  %vm1956 = vcmask 15368
  %1957 = vst.msk [vmem:[%s8] sm:$0xff] %vm1956, %v1951
  %1958 = vst.msk [vmem:[%s8 + $0x8] sm:$0xff] %vm1956, %v1953
  // Predicated region
  $region34: #{wavenet_forward_pallas.1} parent=0 // pred_check
    _
  $region35: #{wavenet_forward_pallas.1} parent=0 // pred_check_branch
    %1960 = sbr.rel (0) target = $region37
  $region36: #{wavenet_forward_pallas.1} parent=0 // pred_region
    _
  $region37: #{wavenet_forward_pallas.1} parent=0 // pred_fallthru
    _
  // Predicated region
  $region38: #{wavenet_forward_pallas.1} parent=0 // pred_check
    _
  $region39: #{wavenet_forward_pallas.1} parent=0 // pred_check_branch
    %1962 = sbr.rel (0) target = $region41
  $region40: #{wavenet_forward_pallas.1} parent=0 // pred_region
    _
  $region41: #{wavenet_forward_pallas.1} parent=0 // pred_fallthru
    _

</llo_original>
